<compile_context>
chip_gen: v6e
topology: v6e:2x2x1
jax: 0.10.0
libtpu: 0.0.40
codegen_flags: <defaults>
</compile_context>

<pallas_src>
import functools

import jax
import jax.numpy as jnp
from jax.experimental import pallas as pl
from jax.experimental.pallas import tpu as pltpu


# ----------------------------------------------------------------------------
# Kernel 1: one GCN layer, tiled over (node-row blocks i, contraction blocks k)
#   acc[i]  += A[i,k] @ Xs[k]                      (A exact 0/1/2 bf16, f32 acc;
#                                                   Xs = D^-1/2-row-scaled X)
#   out[i]   = relu((drow[i] * acc[i]) @ W + b)    (at last k; optional extra
#                                                   * drow[i] to pre-scale for
#                                                   the next layer)
# ----------------------------------------------------------------------------
def gcn_layer_kernel(a_ref, drow_ref, x_ref, w_ref, b_ref, out_ref, acc_ref,
                     *, tk, x_resident, scale_output):
    k = pl.program_id(1)

    @pl.when(k == 0)
    def _init():
        acc_ref[...] = jnp.zeros_like(acc_ref)

    if x_resident:
        start = pl.multiple_of(k * tk, tk)
        x_blk = x_ref[pl.ds(start, tk), :]           # resident X, sliced in VMEM
    else:
        x_blk = x_ref[...]                           # streamed (tk, f_pad) block

    # Adjacency tile is used as-is (exact small integers in bf16); all
    # normalization has been hoisted out of this hot loop.
    acc_ref[...] += jnp.dot(a_ref[...], x_blk,
                            preferred_element_type=jnp.float32)

    @pl.when(k == pl.num_programs(1) - 1)
    def _finalize():
        drow = drow_ref[...]                          # (tm, 1) f32
        ax = acc_ref[...] * drow                      # row D^-1/2, once per tile
        h = jnp.dot(ax.astype(jnp.bfloat16), w_ref[...],
                    preferred_element_type=jnp.float32) + b_ref[...]
        h = jnp.maximum(h, 0.0)
        if scale_output:
            # Pre-scale rows for the next GCN layer's column normalization;
            # also zeroes padded rows (drow == 0 there).
            h = h * drow
        out_ref[...] = h.astype(out_ref.dtype)


def _gcn_layer(adj_p, drow, x_p, w_p, b_p, *, tm, tk, x_resident, scale_output,
               vmem_limit):
    n_pad = adj_p.shape[0]
    f_pad = x_p.shape[1]
    h_pad = w_p.shape[1]
    grid = (n_pad // tm, n_pad // tk)

    if x_resident:
        x_spec = pl.BlockSpec((n_pad, f_pad), lambda i, k: (0, 0))
        x_reads = 1
    else:
        x_spec = pl.BlockSpec((tk, f_pad), lambda i, k: (k, 0))
        x_reads = grid[0]

    flops = 2 * n_pad * n_pad * f_pad + 2 * n_pad * f_pad * h_pad
    bytes_accessed = (n_pad * n_pad * 2                 # bf16 adjacency
                      + n_pad * f_pad * 2 * x_reads     # X (once if resident)
                      + n_pad * h_pad * 2               # bf16 output
                      + f_pad * h_pad * 2 + h_pad * 4   # W, b
                      + n_pad * 4)                      # d_inv_sqrt rows

    kernel = functools.partial(gcn_layer_kernel, tk=tk,
                               x_resident=x_resident, scale_output=scale_output)

    return pl.pallas_call(
        kernel,
        out_shape=jax.ShapeDtypeStruct((n_pad, h_pad), jnp.bfloat16),
        grid_spec=pltpu.PrefetchScalarGridSpec(
            num_scalar_prefetch=0,
            grid=grid,
            in_specs=[
                pl.BlockSpec((tm, tk), lambda i, k: (i, k)),        # A + I tile
                pl.BlockSpec((tm, 1), lambda i, k: (i, 0)),         # d_inv_sqrt rows
                x_spec,                                             # X (pre-scaled)
                pl.BlockSpec((f_pad, h_pad), lambda i, k: (0, 0)),  # W
                pl.BlockSpec((1, h_pad), lambda i, k: (0, 0)),      # b
            ],
            out_specs=pl.BlockSpec((tm, h_pad), lambda i, k: (i, 0)),
            scratch_shapes=[pltpu.VMEM((tm, f_pad), jnp.float32)],
        ),
        compiler_params=pltpu.CompilerParams(
            dimension_semantics=("parallel", "arbitrary"),
            vmem_limit_bytes=vmem_limit,
        ),
        cost_estimate=pl.CostEstimate(flops=flops, transcendentals=0,
                                      bytes_accessed=bytes_accessed),
    )(adj_p, drow, x_p, w_p, b_p)


# ----------------------------------------------------------------------------
# Kernel 2: global mean pool + linear head, tiled over the node contraction.
#   acc += P[:, k] @ H[k]           (f32 accumulation)
#   out  = acc @ Wh + bh            (at last k)
# ----------------------------------------------------------------------------
def pool_head_kernel(pool_ref, h_ref, wh_ref, bh_ref, out_ref, acc_ref):
    k = pl.program_id(0)

    @pl.when(k == 0)
    def _init():
        acc_ref[...] = jnp.zeros_like(acc_ref)

    acc_ref[...] += jnp.dot(pool_ref[...], h_ref[...],
                            preferred_element_type=jnp.float32)

    @pl.when(k == pl.num_programs(0) - 1)
    def _finalize():
        out_ref[...] = (jnp.dot(acc_ref[...].astype(jnp.bfloat16), wh_ref[...],
                                preferred_element_type=jnp.float32)
                        + bh_ref[...])


def _pool_head(pool_p, h_p, wh_p, bh_p, *, tk, vmem_limit):
    g_pad, n_pad = pool_p.shape
    h_pad = h_p.shape[1]
    c_pad = wh_p.shape[1]
    grid = (n_pad // tk,)

    return pl.pallas_call(
        pool_head_kernel,
        out_shape=jax.ShapeDtypeStruct((g_pad, c_pad), jnp.float32),
        grid_spec=pltpu.PrefetchScalarGridSpec(
            num_scalar_prefetch=0,
            grid=grid,
            in_specs=[
                pl.BlockSpec((g_pad, tk), lambda k: (0, k)),      # pooling matrix
                pl.BlockSpec((tk, h_pad), lambda k: (k, 0)),      # node features
                pl.BlockSpec((h_pad, c_pad), lambda k: (0, 0)),   # head weight
                pl.BlockSpec((1, c_pad), lambda k: (0, 0)),       # head bias
            ],
            out_specs=pl.BlockSpec((g_pad, c_pad), lambda k: (0, 0)),
            scratch_shapes=[pltpu.VMEM((g_pad, h_pad), jnp.float32)],
        ),
        compiler_params=pltpu.CompilerParams(
            dimension_semantics=("arbitrary",),
            vmem_limit_bytes=vmem_limit,
        ),
    )(pool_p, h_p, wh_p, bh_p)


# ----------------------------------------------------------------------------
# Wrapper helpers
# ----------------------------------------------------------------------------
def _round_up(v, m):
    return ((v + m - 1) // m) * m


def _largest_divisor_tile(n_pad, cap):
    """Largest multiple of 128 that divides n_pad and is <= cap (>=128)."""
    best = 128
    t = 128
    limit = min(cap, n_pad)
    while t <= limit:
        if n_pad % t == 0:
            best = t
        t += 128
    return best


def _vmem_limit_bytes():
    try:
        info = pltpu.get_tpu_info()
        cap = int(getattr(info, "vmem_capacity_bytes", 64 * 1024 * 1024))
    except Exception:
        cap = 64 * 1024 * 1024
    if cap >= 100 * 1024 * 1024:      # v5e / v6e: 128 MiB physical VMEM
        return 64 * 1024 * 1024
    return 40 * 1024 * 1024           # v7x: 64 MiB per TC, leave compiler headroom


def _pad2(a, rows, cols, dtype):
    a = a.astype(dtype)
    return jnp.pad(a, ((0, rows - a.shape[0]), (0, cols - a.shape[1])))


# ----------------------------------------------------------------------------
# Forward: backbone (2x GCN) -> global_mean_pool -> linear head.
# ----------------------------------------------------------------------------
def base_one_stage_forward(x, edge_index, batch, params, *, num_graphs):
    """num_graphs must be static (jit static_argname)."""
    n, f_in = x.shape
    hidden = params['w1'].shape[1]
    num_classes = params['wh'].shape[1]

    # --- padded, lane-dense dims ---
    n_pad = _round_up(n, 128)
    f_pad = _round_up(f_in, 128)
    h_pad = _round_up(hidden, 128)
    c_pad = _round_up(num_classes, 128)
    g_pad = _round_up(num_graphs, 8)

    # --- tile selection: divisors of n_pad; keep >=2 row tiles (v7x megacore) ---
    tm_cap = min(512, n_pad // 2) if n_pad >= 256 else n_pad
    tm = _largest_divisor_tile(n_pad, tm_cap)
    tk = _largest_divisor_tile(n_pad, 2048)
    tk_pool = _largest_divisor_tile(n_pad, 4096)

    vmem_limit = _vmem_limit_bytes()
    # Keep X / H1 fully resident in VMEM when their footprint is modest.
    x_resident = (n_pad * f_pad * 2 <= 16 * 1024 * 1024
                  and n_pad * h_pad * 2 <= 16 * 1024 * 1024)

    # --- padded bf16 adjacency (A + I) built directly, no f32 N^2 temp ---
    src, dst = edge_index[0], edge_index[1]
    adj_p = jnp.zeros((n_pad, n_pad), jnp.bfloat16)
    adj_p = adj_p.at[dst, src].set(jnp.bfloat16(1.0))
    node_idx = jnp.arange(n)
    adj_p = adj_p.at[node_idx, node_idx].add(jnp.bfloat16(1.0))   # self loops

    deg = jnp.sum(adj_p, axis=1, dtype=jnp.float32)               # exact small ints
    d_inv_sqrt = jnp.where(deg > 0,
                           jax.lax.rsqrt(jnp.maximum(deg, 1e-12)), 0.0)
    drow = d_inv_sqrt[:, None]                                    # (n_pad, 1) f32

    # --- column normalization folded into X once (O(N*F)) ---
    x_p = jnp.zeros((n_pad, f_pad), jnp.float32).at[:n, :f_in].set(x)
    x_p = (x_p * d_inv_sqrt[:, None]).astype(jnp.bfloat16)

    # --- padded weights (zero padding preserves semantics) ---
    w1_p = _pad2(params['w1'], f_pad, h_pad, jnp.bfloat16)
    b1_p = _pad2(params['b1'], 1, h_pad, jnp.float32)
    w2_p = _pad2(params['w2'], h_pad, h_pad, jnp.bfloat16)
    b2_p = _pad2(params['b2'], 1, h_pad, jnp.float32)
    wh_p = _pad2(params['wh'], h_pad, c_pad, jnp.bfloat16)
    bh_p = _pad2(params['bh'], 1, c_pad, jnp.float32)

    # --- mean-pooling matrix P[g, node] = 1/|graph g| (static num_graphs) ---
    one_hot = (batch[None, :] == jnp.arange(num_graphs)[:, None]).astype(jnp.float32)
    counts = jnp.maximum(jnp.sum(one_hot, axis=1, keepdims=True), 1.0)
    pool_p = _pad2(one_hot / counts, g_pad, n_pad, jnp.bfloat16)  # pad cols zero

    # --- backbone: two tiled GCN layers (bf16 operands, f32 accumulate) ---
    # Layer 1 output is pre-scaled by D^-1/2 rows (scale_output=True) so layer 2
    # can consume it directly; its padded rows are thereby zeroed as well.
    h1 = _gcn_layer(adj_p, drow, x_p, w1_p, b1_p, tm=tm, tk=tk,
                    x_resident=x_resident, scale_output=True,
                    vmem_limit=vmem_limit)
    h2 = _gcn_layer(adj_p, drow, h1, w2_p, b2_p, tm=tm, tk=tk,
                    x_resident=x_resident, scale_output=False,
                    vmem_limit=vmem_limit)

    # --- pooling + head (pad-node columns of P are zero -> relu(b2) pad rows
    #     of H2 are masked) ---
    out_p = _pool_head(pool_p, h2, wh_p, bh_p, tk=tk_pool, vmem_limit=vmem_limit)
    return out_p[:num_graphs, :num_classes]


# ----------------------------------------------------------------------------
# Parameter init + pure-JAX f32 reference (same semantics)
# ----------------------------------------------------------------------------
def init_params(key, in_feats, hidden, num_classes):
    ks = jax.random.split(key, 3)

    def glorot(k, shape):
        lim = (6.0 / (shape[0] + shape[1])) ** 0.5
        return jax.random.uniform(k, shape, jnp.float32, -lim, lim)

    return dict(
        w1=glorot(ks[0], (in_feats, hidden)),
        b1=jnp.zeros((1, hidden), jnp.float32),
        w2=glorot(ks[1], (hidden, hidden)),
        b2=jnp.zeros((1, hidden), jnp.float32),
        wh=glorot(ks[2], (hidden, num_classes)),
        bh=jnp.zeros((1, num_classes), jnp.float32),
    )


def reference_forward(x, edge_index, batch, params, num_graphs):
    n = x.shape[0]
    src, dst = edge_index[0], edge_index[1]
    adj = jnp.zeros((n, n), jnp.float32).at[dst, src].set(1.0) + jnp.eye(n)
    deg = jnp.sum(adj, axis=1)
    dis = jnp.where(deg > 0, 1.0 / jnp.sqrt(deg), 0.0)
    adj_hat = dis[:, None] * adj * dis[None, :]

    h = jnp.maximum(adj_hat @ x @ params['w1'] + params['b1'], 0.0)
    h = jnp.maximum(adj_hat @ h @ params['w2'] + params['b2'], 0.0)

    one_hot = (batch[None, :] == jnp.arange(num_graphs)[:, None]).astype(jnp.float32)
    pool = one_hot / jnp.maximum(jnp.sum(one_hot, axis=1, keepdims=True), 1.0)
    return pool @ h @ params['wh'] + params['bh']


if __name__ == "__main__":
    key = jax.random.PRNGKey(0)
    k_x, k_p = jax.random.split(key)

    # Small graph batch: 16 nodes, 8 input features, hidden 32,
    # 2 graphs (8 nodes each, ring topology), 4 output classes.
    N, F_IN, HIDDEN, NUM_CLASSES, NUM_GRAPHS = 16, 8, 32, 4, 2

    x = jax.random.normal(k_x, (N, F_IN), jnp.float32)

    src = jnp.array([i for i in range(8)] + [8 + i for i in range(8)], jnp.int32)
    dst = jnp.array([(i + 1) % 8 for i in range(8)]
                    + [8 + (i + 1) % 8 for i in range(8)], jnp.int32)
    edge_index = jnp.stack([jnp.concatenate([src, dst]),
                            jnp.concatenate([dst, src])])      # undirected, [2, 2E]

    batch = jnp.concatenate([jnp.zeros(8, jnp.int32), jnp.ones(8, jnp.int32)])

    params = init_params(k_p, F_IN, HIDDEN, NUM_CLASSES)

    fwd = jax.jit(base_one_stage_forward, static_argnames=("num_graphs",))
    out = fwd(x, edge_index, batch, params, num_graphs=NUM_GRAPHS)
    jax.block_until_ready(out)

    ref = reference_forward(x, edge_index, batch, params, NUM_GRAPHS)
    assert out.shape == (NUM_GRAPHS, NUM_CLASSES)
    # bf16 operands / f32 accumulation -> looser tolerance than pure f32.
    assert jnp.allclose(out, ref, atol=5e-2, rtol=5e-2), \
        f"max abs diff {jnp.max(jnp.abs(out - ref))}"

    print("KERNEL_OK")
</pallas_src>

<mosaic_0001>
module attributes {stable_mosaic.version = 11 : i64} {
  func.func @gcn_layer_kernel(%arg0: i32, %arg1: i32, %arg2: memref<128x128xbf16, #tpu.memory_space<vmem>>, %arg3: memref<128x1xf32, #tpu.memory_space<vmem>>, %arg4: memref<128x128xbf16, #tpu.memory_space<vmem>>, %arg5: memref<128x128xbf16, #tpu.memory_space<vmem>>, %arg6: memref<1x128xf32, #tpu.memory_space<vmem>>, %arg7: memref<128x128xbf16, #tpu.memory_space<vmem>>, %arg8: memref<128x128xf32, #tpu.memory_space<vmem>>) attributes {dimension_semantics = [#tpu.dimension_semantics<parallel>, #tpu.dimension_semantics<arbitrary>], iteration_bounds = array<i64: 1, 1>, scalar_prefetch = 0 : i64, scratch_operands = 1 : i64, tpu.core_type = #tpu.core_type<tc>, window_params = [{transform_indices = @transform_0, window_bounds = array<i64: 128, 128>}, {transform_indices = @transform_1, window_bounds = array<i64: 128, 1>}, {pipeline_mode = #tpu.pipeline_mode<synchronous>, transform_indices = @transform_2, window_bounds = array<i64: 128, 128>}, {pipeline_mode = #tpu.pipeline_mode<synchronous>, transform_indices = @transform_3, window_bounds = array<i64: 128, 128>}, {pipeline_mode = #tpu.pipeline_mode<synchronous>, transform_indices = @transform_4, window_bounds = array<i64: 1, 128>}, {transform_indices = @transform_5, window_bounds = array<i64: 128, 128>}]} {
    %c0_i32 = arith.constant 0 : i32
    %0 = arith.cmpi eq, %arg1, %c0_i32 : i32
    %1 = arith.extui %0 : i1 to i32
    %c0_i32_0 = arith.constant 0 : i32
    %2 = arith.cmpi ne, %1, %c0_i32_0 : i32
    scf.if %2 {
      %cst_9 = arith.constant 0.000000e+00 : f32
      %15 = vector.broadcast %cst_9 : f32 to vector<128x128xf32>
      %c0_10 = arith.constant 0 : index
      %c0_11 = arith.constant 0 : index
      %16 = vector.load %arg8[%c0_10, %c0_11] : memref<128x128xf32, #tpu.memory_space<vmem>>, vector<128x128xf32>
      tpu.vector_store %arg8[%c0_10, %c0_11], %15 {strides = array<i32>} : memref<128x128xf32, #tpu.memory_space<vmem>>, vector<128x128xf32>,
    } else {
    }
    %c128_i32 = arith.constant 128 : i32
    %3 = arith.muli %arg1, %c128_i32 : i32
    %4 = tpu.assume_multiple %3, 128 : i32
    %5 = arith.index_cast %4 : i32 to index
    %c0 = arith.constant 0 : index
    %6 = vector.load %arg4[%5, %c0] : memref<128x128xbf16, #tpu.memory_space<vmem>>, vector<128x128xbf16>
    %c0_1 = arith.constant 0 : index
    %c0_2 = arith.constant 0 : index
    %7 = vector.load %arg8[%c0_1, %c0_2] : memref<128x128xf32, #tpu.memory_space<vmem>>, vector<128x128xf32>
    %c0_3 = arith.constant 0 : index
    %c0_4 = arith.constant 0 : index
    %8 = vector.load %arg2[%c0_3, %c0_4] : memref<128x128xbf16, #tpu.memory_space<vmem>>, vector<128x128xbf16>
    %cst = arith.constant dense<0.000000e+00> : vector<128x128xf32>
    %9 = tpu.matmul %8, %6, %cst {dimension_numbers = #tpu.dot_dimension_numbers<[1], [0], [0], [1], [0, 0, 1, 1], [], []>} : vector<128x128xbf16>, vector<128x128xbf16>, vector<128x128xf32> -> vector<128x128xf32>
    %10 = arith.addf %7, %9 : vector<128x128xf32>
    %c0_5 = arith.constant 0 : index
    %c0_6 = arith.constant 0 : index
    %11 = vector.load %arg8[%c0_5, %c0_6] : memref<128x128xf32, #tpu.memory_space<vmem>>, vector<128x128xf32>
    tpu.vector_store %arg8[%c0_5, %c0_6], %10 {strides = array<i32>} : memref<128x128xf32, #tpu.memory_space<vmem>>, vector<128x128xf32>,
    %c0_i32_7 = arith.constant 0 : i32
    %12 = arith.cmpi eq, %arg1, %c0_i32_7 : i32
    %13 = arith.extui %12 : i1 to i32
    %c0_i32_8 = arith.constant 0 : i32
    %14 = arith.cmpi ne, %13, %c0_i32_8 : i32
    scf.if %14 {
      %c0_9 = arith.constant 0 : index
      %c0_10 = arith.constant 0 : index
      %15 = vector.load %arg3[%c0_9, %c0_10] : memref<128x1xf32, #tpu.memory_space<vmem>>, vector<128x1xf32>
      %c0_11 = arith.constant 0 : index
      %c0_12 = arith.constant 0 : index
      %16 = vector.load %arg8[%c0_11, %c0_12] : memref<128x128xf32, #tpu.memory_space<vmem>>, vector<128x128xf32>
      %17 = vector.broadcast %15 : vector<128x1xf32> to vector<128x128xf32>
      %18 = arith.mulf %16, %17 : vector<128x128xf32>
      %19 = arith.truncf %18 : vector<128x128xf32> to vector<128x128xbf16>
      %c0_13 = arith.constant 0 : index
      %c0_14 = arith.constant 0 : index
      %20 = vector.load %arg5[%c0_13, %c0_14] : memref<128x128xbf16, #tpu.memory_space<vmem>>, vector<128x128xbf16>
      %cst_15 = arith.constant dense<0.000000e+00> : vector<128x128xf32>
      %21 = tpu.matmul %19, %20, %cst_15 {dimension_numbers = #tpu.dot_dimension_numbers<[1], [0], [0], [1], [0, 0, 1, 1], [], []>} : vector<128x128xbf16>, vector<128x128xbf16>, vector<128x128xf32> -> vector<128x128xf32>
      %c0_16 = arith.constant 0 : index
      %c0_17 = arith.constant 0 : index
      %22 = vector.load %arg6[%c0_16, %c0_17] : memref<1x128xf32, #tpu.memory_space<vmem>>, vector<1x128xf32>
      %23 = vector.broadcast %22 : vector<1x128xf32> to vector<128x128xf32>
      %24 = arith.addf %21, %23 : vector<128x128xf32>
      %cst_18 = arith.constant 0.000000e+00 : f32
      %25 = vector.broadcast %cst_18 : f32 to vector<128x128xf32>
      %26 = arith.maximumf %24, %25 : vector<128x128xf32>
      %27 = vector.broadcast %15 : vector<128x1xf32> to vector<128x128xf32>
      %28 = arith.mulf %26, %27 : vector<128x128xf32>
      %29 = arith.truncf %28 : vector<128x128xf32> to vector<128x128xbf16>
      %c0_19 = arith.constant 0 : index
      %c0_20 = arith.constant 0 : index
      %30 = vector.load %arg7[%c0_19, %c0_20] : memref<128x128xbf16, #tpu.memory_space<vmem>>, vector<128x128xbf16>
      tpu.vector_store %arg7[%c0_19, %c0_20], %29 {strides = array<i32>} : memref<128x128xbf16, #tpu.memory_space<vmem>>, vector<128x128xbf16>,
    } else {
    }
    return
  }
  func.func @transform_0(%arg0: i32, %arg1: i32) -> (i32, i32) {
    %c0_i32 = arith.constant 0 : i32
    return %arg0, %arg1 : i32, i32
  }
  func.func @transform_1(%arg0: i32, %arg1: i32) -> (i32, i32) {
    %c0_i32 = arith.constant 0 : i32
    %c0_i32_0 = arith.constant 0 : i32
    return %arg0, %c0_i32 : i32, i32
  }
  func.func @transform_2(%arg0: i32, %arg1: i32) -> (i32, i32) {
    %c0_i32 = arith.constant 0 : i32
    %c0_i32_0 = arith.constant 0 : i32
    %c0_i32_1 = arith.constant 0 : i32
    return %c0_i32, %c0_i32_0 : i32, i32
  }
  func.func @transform_3(%arg0: i32, %arg1: i32) -> (i32, i32) {
    %c0_i32 = arith.constant 0 : i32
    %c0_i32_0 = arith.constant 0 : i32
    %c0_i32_1 = arith.constant 0 : i32
    return %c0_i32, %c0_i32_0 : i32, i32
  }
  func.func @transform_4(%arg0: i32, %arg1: i32) -> (i32, i32) {
    %c0_i32 = arith.constant 0 : i32
    %c0_i32_0 = arith.constant 0 : i32
    %c0_i32_1 = arith.constant 0 : i32
    return %c0_i32, %c0_i32_0 : i32, i32
  }
  func.func @transform_5(%arg0: i32, %arg1: i32) -> (i32, i32) {
    %c0_i32 = arith.constant 0 : i32
    %c0_i32_0 = arith.constant 0 : i32
    return %arg0, %c0_i32 : i32, i32
  }
}

module attributes {stable_mosaic.version = 11 : i64} {
  func.func @gcn_layer_kernel(%arg0: i32, %arg1: i32, %arg2: memref<128x128xbf16, #tpu.memory_space<vmem>>, %arg3: memref<128x1xf32, #tpu.memory_space<vmem>>, %arg4: memref<128x128xbf16, #tpu.memory_space<vmem>>, %arg5: memref<128x128xbf16, #tpu.memory_space<vmem>>, %arg6: memref<1x128xf32, #tpu.memory_space<vmem>>, %arg7: memref<128x128xbf16, #tpu.memory_space<vmem>>, %arg8: memref<128x128xf32, #tpu.memory_space<vmem>>) attributes {dimension_semantics = [#tpu.dimension_semantics<parallel>, #tpu.dimension_semantics<arbitrary>], iteration_bounds = array<i64: 1, 1>, scalar_prefetch = 0 : i64, scratch_operands = 1 : i64, tpu.core_type = #tpu.core_type<tc>, window_params = [{transform_indices = @transform_0, window_bounds = array<i64: 128, 128>}, {transform_indices = @transform_1, window_bounds = array<i64: 128, 1>}, {pipeline_mode = #tpu.pipeline_mode<synchronous>, transform_indices = @transform_2, window_bounds = array<i64: 128, 128>}, {pipeline_mode = #tpu.pipeline_mode<synchronous>, transform_indices = @transform_3, window_bounds = array<i64: 128, 128>}, {pipeline_mode = #tpu.pipeline_mode<synchronous>, transform_indices = @transform_4, window_bounds = array<i64: 1, 128>}, {transform_indices = @transform_5, window_bounds = array<i64: 128, 128>}]} {
    %c0_i32 = arith.constant 0 : i32
    %0 = arith.cmpi eq, %arg1, %c0_i32 : i32
    %1 = arith.extui %0 : i1 to i32
    %c0_i32_0 = arith.constant 0 : i32
    %2 = arith.cmpi ne, %1, %c0_i32_0 : i32
    scf.if %2 {
      %cst_9 = arith.constant 0.000000e+00 : f32
      %15 = vector.broadcast %cst_9 : f32 to vector<128x128xf32>
      %c0_10 = arith.constant 0 : index
      %c0_11 = arith.constant 0 : index
      %16 = vector.load %arg8[%c0_10, %c0_11] : memref<128x128xf32, #tpu.memory_space<vmem>>, vector<128x128xf32>
      tpu.vector_store %arg8[%c0_10, %c0_11], %15 {strides = array<i32>} : memref<128x128xf32, #tpu.memory_space<vmem>>, vector<128x128xf32>,
    } else {
    }
    %c128_i32 = arith.constant 128 : i32
    %3 = arith.muli %arg1, %c128_i32 : i32
    %4 = tpu.assume_multiple %3, 128 : i32
    %5 = arith.index_cast %4 : i32 to index
    %c0 = arith.constant 0 : index
    %6 = vector.load %arg4[%5, %c0] : memref<128x128xbf16, #tpu.memory_space<vmem>>, vector<128x128xbf16>
    %c0_1 = arith.constant 0 : index
    %c0_2 = arith.constant 0 : index
    %7 = vector.load %arg8[%c0_1, %c0_2] : memref<128x128xf32, #tpu.memory_space<vmem>>, vector<128x128xf32>
    %c0_3 = arith.constant 0 : index
    %c0_4 = arith.constant 0 : index
    %8 = vector.load %arg2[%c0_3, %c0_4] : memref<128x128xbf16, #tpu.memory_space<vmem>>, vector<128x128xbf16>
    %cst = arith.constant dense<0.000000e+00> : vector<128x128xf32>
    %9 = tpu.matmul %8, %6, %cst {dimension_numbers = #tpu.dot_dimension_numbers<[1], [0], [0], [1], [0, 0, 1, 1], [], []>} : vector<128x128xbf16>, vector<128x128xbf16>, vector<128x128xf32> -> vector<128x128xf32>
    %10 = arith.addf %7, %9 : vector<128x128xf32>
    %c0_5 = arith.constant 0 : index
    %c0_6 = arith.constant 0 : index
    %11 = vector.load %arg8[%c0_5, %c0_6] : memref<128x128xf32, #tpu.memory_space<vmem>>, vector<128x128xf32>
    tpu.vector_store %arg8[%c0_5, %c0_6], %10 {strides = array<i32>} : memref<128x128xf32, #tpu.memory_space<vmem>>, vector<128x128xf32>,
    %c0_i32_7 = arith.constant 0 : i32
    %12 = arith.cmpi eq, %arg1, %c0_i32_7 : i32
    %13 = arith.extui %12 : i1 to i32
    %c0_i32_8 = arith.constant 0 : i32
    %14 = arith.cmpi ne, %13, %c0_i32_8 : i32
    scf.if %14 {
      %c0_9 = arith.constant 0 : index
      %c0_10 = arith.constant 0 : index
      %15 = vector.load %arg3[%c0_9, %c0_10] : memref<128x1xf32, #tpu.memory_space<vmem>>, vector<128x1xf32>
      %c0_11 = arith.constant 0 : index
      %c0_12 = arith.constant 0 : index
      %16 = vector.load %arg8[%c0_11, %c0_12] : memref<128x128xf32, #tpu.memory_space<vmem>>, vector<128x128xf32>
      %17 = vector.broadcast %15 : vector<128x1xf32> to vector<128x128xf32>
      %18 = arith.mulf %16, %17 : vector<128x128xf32>
      %19 = arith.truncf %18 : vector<128x128xf32> to vector<128x128xbf16>
      %c0_13 = arith.constant 0 : index
      %c0_14 = arith.constant 0 : index
      %20 = vector.load %arg5[%c0_13, %c0_14] : memref<128x128xbf16, #tpu.memory_space<vmem>>, vector<128x128xbf16>
      %cst_15 = arith.constant dense<0.000000e+00> : vector<128x128xf32>
      %21 = tpu.matmul %19, %20, %cst_15 {dimension_numbers = #tpu.dot_dimension_numbers<[1], [0], [0], [1], [0, 0, 1, 1], [], []>} : vector<128x128xbf16>, vector<128x128xbf16>, vector<128x128xf32> -> vector<128x128xf32>
      %c0_16 = arith.constant 0 : index
      %c0_17 = arith.constant 0 : index
      %22 = vector.load %arg6[%c0_16, %c0_17] : memref<1x128xf32, #tpu.memory_space<vmem>>, vector<1x128xf32>
      %23 = vector.broadcast %22 : vector<1x128xf32> to vector<128x128xf32>
      %24 = arith.addf %21, %23 : vector<128x128xf32>
      %cst_18 = arith.constant 0.000000e+00 : f32
      %25 = vector.broadcast %cst_18 : f32 to vector<128x128xf32>
      %26 = arith.maximumf %24, %25 : vector<128x128xf32>
      %27 = arith.truncf %26 : vector<128x128xf32> to vector<128x128xbf16>
      %c0_19 = arith.constant 0 : index
      %c0_20 = arith.constant 0 : index
      %28 = vector.load %arg7[%c0_19, %c0_20] : memref<128x128xbf16, #tpu.memory_space<vmem>>, vector<128x128xbf16>
      tpu.vector_store %arg7[%c0_19, %c0_20], %27 {strides = array<i32>} : memref<128x128xbf16, #tpu.memory_space<vmem>>, vector<128x128xbf16>,
    } else {
    }
    return
  }
  func.func @transform_0(%arg0: i32, %arg1: i32) -> (i32, i32) {
    %c0_i32 = arith.constant 0 : i32
    return %arg0, %arg1 : i32, i32
  }
  func.func @transform_1(%arg0: i32, %arg1: i32) -> (i32, i32) {
    %c0_i32 = arith.constant 0 : i32
    %c0_i32_0 = arith.constant 0 : i32
    return %arg0, %c0_i32 : i32, i32
  }
  func.func @transform_2(%arg0: i32, %arg1: i32) -> (i32, i32) {
    %c0_i32 = arith.constant 0 : i32
    %c0_i32_0 = arith.constant 0 : i32
    %c0_i32_1 = arith.constant 0 : i32
    return %c0_i32, %c0_i32_0 : i32, i32
  }
  func.func @transform_3(%arg0: i32, %arg1: i32) -> (i32, i32) {
    %c0_i32 = arith.constant 0 : i32
    %c0_i32_0 = arith.constant 0 : i32
    %c0_i32_1 = arith.constant 0 : i32
    return %c0_i32, %c0_i32_0 : i32, i32
  }
  func.func @transform_4(%arg0: i32, %arg1: i32) -> (i32, i32) {
    %c0_i32 = arith.constant 0 : i32
    %c0_i32_0 = arith.constant 0 : i32
    %c0_i32_1 = arith.constant 0 : i32
    return %c0_i32, %c0_i32_0 : i32, i32
  }
  func.func @transform_5(%arg0: i32, %arg1: i32) -> (i32, i32) {
    %c0_i32 = arith.constant 0 : i32
    %c0_i32_0 = arith.constant 0 : i32
    return %arg0, %c0_i32 : i32, i32
  }
}

module attributes {stable_mosaic.version = 11 : i64} {
  func.func @pool_head_kernel(%arg0: i32, %arg1: memref<8x128xbf16, #tpu.memory_space<vmem>>, %arg2: memref<128x128xbf16, #tpu.memory_space<vmem>>, %arg3: memref<128x128xbf16, #tpu.memory_space<vmem>>, %arg4: memref<1x128xf32, #tpu.memory_space<vmem>>, %arg5: memref<8x128xf32, #tpu.memory_space<vmem>>, %arg6: memref<8x128xf32, #tpu.memory_space<vmem>>) attributes {dimension_semantics = [#tpu.dimension_semantics<arbitrary>], iteration_bounds = array<i64: 1>, scalar_prefetch = 0 : i64, scratch_operands = 1 : i64, tpu.core_type = #tpu.core_type<tc>, window_params = [{transform_indices = @transform_0, window_bounds = array<i64: 8, 128>}, {transform_indices = @transform_1, window_bounds = array<i64: 128, 128>}, {pipeline_mode = #tpu.pipeline_mode<synchronous>, transform_indices = @transform_2, window_bounds = array<i64: 128, 128>}, {pipeline_mode = #tpu.pipeline_mode<synchronous>, transform_indices = @transform_3, window_bounds = array<i64: 1, 128>}, {pipeline_mode = #tpu.pipeline_mode<synchronous>, transform_indices = @transform_4, window_bounds = array<i64: 8, 128>}]} {
    %c0_i32 = arith.constant 0 : i32
    %0 = arith.cmpi eq, %arg0, %c0_i32 : i32
    %1 = arith.extui %0 : i1 to i32
    %c0_i32_0 = arith.constant 0 : i32
    %2 = arith.cmpi ne, %1, %c0_i32_0 : i32
    scf.if %2 {
      %cst_10 = arith.constant 0.000000e+00 : f32
      %12 = vector.broadcast %cst_10 : f32 to vector<8x128xf32>
      %c0_11 = arith.constant 0 : index
      %c0_12 = arith.constant 0 : index
      %13 = vector.load %arg6[%c0_11, %c0_12] : memref<8x128xf32, #tpu.memory_space<vmem>>, vector<8x128xf32>
      tpu.vector_store %arg6[%c0_11, %c0_12], %12 {strides = array<i32>} : memref<8x128xf32, #tpu.memory_space<vmem>>, vector<8x128xf32>,
    } else {
    }
    %c0 = arith.constant 0 : index
    %c0_1 = arith.constant 0 : index
    %3 = vector.load %arg6[%c0, %c0_1] : memref<8x128xf32, #tpu.memory_space<vmem>>, vector<8x128xf32>
    %c0_2 = arith.constant 0 : index
    %c0_3 = arith.constant 0 : index
    %4 = vector.load %arg1[%c0_2, %c0_3] : memref<8x128xbf16, #tpu.memory_space<vmem>>, vector<8x128xbf16>
    %c0_4 = arith.constant 0 : index
    %c0_5 = arith.constant 0 : index
    %5 = vector.load %arg2[%c0_4, %c0_5] : memref<128x128xbf16, #tpu.memory_space<vmem>>, vector<128x128xbf16>
    %cst = arith.constant dense<0.000000e+00> : vector<8x128xf32>
    %6 = tpu.matmul %4, %5, %cst {dimension_numbers = #tpu.dot_dimension_numbers<[1], [0], [0], [1], [0, 0, 1, 1], [], []>} : vector<8x128xbf16>, vector<128x128xbf16>, vector<8x128xf32> -> vector<8x128xf32>
    %7 = arith.addf %3, %6 : vector<8x128xf32>
    %c0_6 = arith.constant 0 : index
    %c0_7 = arith.constant 0 : index
    %8 = vector.load %arg6[%c0_6, %c0_7] : memref<8x128xf32, #tpu.memory_space<vmem>>, vector<8x128xf32>
    tpu.vector_store %arg6[%c0_6, %c0_7], %7 {strides = array<i32>} : memref<8x128xf32, #tpu.memory_space<vmem>>, vector<8x128xf32>,
    %c0_i32_8 = arith.constant 0 : i32
    %9 = arith.cmpi eq, %arg0, %c0_i32_8 : i32
    %10 = arith.extui %9 : i1 to i32
    %c0_i32_9 = arith.constant 0 : i32
    %11 = arith.cmpi ne, %10, %c0_i32_9 : i32
    scf.if %11 {
      %c0_10 = arith.constant 0 : index
      %c0_11 = arith.constant 0 : index
      %12 = vector.load %arg6[%c0_10, %c0_11] : memref<8x128xf32, #tpu.memory_space<vmem>>, vector<8x128xf32>
      %13 = arith.truncf %12 : vector<8x128xf32> to vector<8x128xbf16>
      %c0_12 = arith.constant 0 : index
      %c0_13 = arith.constant 0 : index
      %14 = vector.load %arg3[%c0_12, %c0_13] : memref<128x128xbf16, #tpu.memory_space<vmem>>, vector<128x128xbf16>
      %cst_14 = arith.constant dense<0.000000e+00> : vector<8x128xf32>
      %15 = tpu.matmul %13, %14, %cst_14 {dimension_numbers = #tpu.dot_dimension_numbers<[1], [0], [0], [1], [0, 0, 1, 1], [], []>} : vector<8x128xbf16>, vector<128x128xbf16>, vector<8x128xf32> -> vector<8x128xf32>
      %c0_15 = arith.constant 0 : index
      %c0_16 = arith.constant 0 : index
      %16 = vector.load %arg4[%c0_15, %c0_16] : memref<1x128xf32, #tpu.memory_space<vmem>>, vector<1x128xf32>
      %17 = vector.broadcast %16 : vector<1x128xf32> to vector<8x128xf32>
      %18 = arith.addf %15, %17 : vector<8x128xf32>
      %c0_17 = arith.constant 0 : index
      %c0_18 = arith.constant 0 : index
      %19 = vector.load %arg5[%c0_17, %c0_18] : memref<8x128xf32, #tpu.memory_space<vmem>>, vector<8x128xf32>
      tpu.vector_store %arg5[%c0_17, %c0_18], %18 {strides = array<i32>} : memref<8x128xf32, #tpu.memory_space<vmem>>, vector<8x128xf32>,
    } else {
    }
    return
  }
  func.func @transform_0(%arg0: i32) -> (i32, i32) {
    %c0_i32 = arith.constant 0 : i32
    %c0_i32_0 = arith.constant 0 : i32
    return %c0_i32, %arg0 : i32, i32
  }
  func.func @transform_1(%arg0: i32) -> (i32, i32) {
    %c0_i32 = arith.constant 0 : i32
    %c0_i32_0 = arith.constant 0 : i32
    return %arg0, %c0_i32 : i32, i32
  }
  func.func @transform_2(%arg0: i32) -> (i32, i32) {
    %c0_i32 = arith.constant 0 : i32
    %c0_i32_0 = arith.constant 0 : i32
    %c0_i32_1 = arith.constant 0 : i32
    return %c0_i32, %c0_i32_0 : i32, i32
  }
  func.func @transform_3(%arg0: i32) -> (i32, i32) {
    %c0_i32 = arith.constant 0 : i32
    %c0_i32_0 = arith.constant 0 : i32
    %c0_i32_1 = arith.constant 0 : i32
    return %c0_i32, %c0_i32_0 : i32, i32
  }
  func.func @transform_4(%arg0: i32) -> (i32, i32) {
    %c0_i32 = arith.constant 0 : i32
    %c0_i32_0 = arith.constant 0 : i32
    %c0_i32_1 = arith.constant 0 : i32
    return %c0_i32, %c0_i32_0 : i32, i32
  }
}

</mosaic_0001>

<llo_original>
// kernel: base_one_stage_forward.4
$region0: #{base_one_stage_forward.4}
  #allocation0 [shape = 'u32[]', space=smem, size = 0x4, offset = 0x4, fixed_abs, tag = 'smem constant byte address 0x4 - core index']
  #allocation1 [shape = 'u32[144,128]{1,0:T(1,128)}', space=vmem, size = 0x12000, scoped, tag = 'internal scratch']
  #allocation2 [shape = 'f32[128,128]{1,0:T(8,128)}', space=vmem, size = 0x10000, scoped, tag = 'scratch operand']
  %s0 = inlined_call_operand.vmem [shape: bf16[128,128], index: 0, kind: input, shape index: {}]
  %s1 = inlined_call_operand.vmem [shape: f32[128,1], index: 1, kind: input, shape index: {}]
  %s2 = inlined_call_operand.vmem [shape: bf16[128,128], index: 2, kind: input, shape index: {}]
  %s3 = inlined_call_operand.vmem [shape: bf16[128,128], index: 3, kind: input, shape index: {}]
  %s4 = inlined_call_operand.vmem [shape: f32[1,128], index: 4, kind: input, shape index: {}]
  %s5 = inlined_call_operand.vmem [shape: bf16[128,128], index: 5, kind: output, shape index: {}]
  %s6 = sld [smem:[#allocation0]]
  $region38: #{base_one_stage_forward.4} parent=0
    _
  %s8 = ssub.s32 1, %s6
  %s9 = scalar_select 0, %s8, %s6
  // Predicated region
  $region2: #{base_one_stage_forward.4} parent=0 // pred_check
    _
  $region3: #{base_one_stage_forward.4} parent=0 // pred_check_branch
    %11 = sbr.rel (0) target = $region5
  $region4: #{base_one_stage_forward.4} parent=0 // pred_region
    _
  $region5: #{base_one_stage_forward.4} parent=0 // pred_fallthru
    _
  // Predicated region
  $region6: #{base_one_stage_forward.4} parent=0 // pred_check
    _
  $region7: #{base_one_stage_forward.4} parent=0 // pred_check_branch
    %13 = sbr.rel (0) target = $region9
  $region8: #{base_one_stage_forward.4} parent=0 // pred_region
    _
  $region9: #{base_one_stage_forward.4} parent=0 // pred_fallthru
    _
  // Predicated region
  $region10: #{base_one_stage_forward.4} parent=0 // pred_check
    _
  $region11: #{base_one_stage_forward.4} parent=0 // pred_check_branch
    %15 = sbr.rel (0) target = $region13
  $region12: #{base_one_stage_forward.4} parent=0 // pred_region
    _
  $region13: #{base_one_stage_forward.4} parent=0 // pred_fallthru
    _
  // Predicated region
  $region14: #{base_one_stage_forward.4} parent=0 // pred_check
    _
  $region15: #{base_one_stage_forward.4} parent=0 // pred_check_branch
    %17 = sbr.rel (0) target = $region17
  $region16: #{base_one_stage_forward.4} parent=0 // pred_region
    _
  $region17: #{base_one_stage_forward.4} parent=0 // pred_fallthru
    _
  // Predicated region
  $region18: #{base_one_stage_forward.4} parent=0 // pred_check
    _
  $region19: #{base_one_stage_forward.4} parent=0 // pred_check_branch
    %19 = sbr.rel (0) target = $region21
  $region20: #{base_one_stage_forward.4} parent=0 // pred_region
    _
  $region21: #{base_one_stage_forward.4} parent=0 // pred_fallthru
    _
  %p21 = scmp.eq.s32.totalorder 0, 0
  // Predicated region
  $region22: #{base_one_stage_forward.4} parent=0 // pred_check
    %p22 = pneg %p21
  $region23: #{base_one_stage_forward.4} parent=0 // pred_check_branch
    %24 = sbr.rel (%p22) target = $region25
  $region24: #{base_one_stage_forward.4} parent=0 // pred_region
    %25 = vst [vmem:[#allocation2] sm:$0xff] 0.0
    %26 = vst [vmem:[#allocation2 + $0x8] sm:$0xff] 0.0
    %27 = vst [vmem:[#allocation2 + $0x10] sm:$0xff] 0.0
    %28 = vst [vmem:[#allocation2 + $0x18] sm:$0xff] 0.0
    %29 = vst [vmem:[#allocation2 + $0x20] sm:$0xff] 0.0
    %30 = vst [vmem:[#allocation2 + $0x28] sm:$0xff] 0.0
    %31 = vst [vmem:[#allocation2 + $0x30] sm:$0xff] 0.0
    %32 = vst [vmem:[#allocation2 + $0x38] sm:$0xff] 0.0
    %33 = vst [vmem:[#allocation2 + $0x40] sm:$0xff] 0.0
    %34 = vst [vmem:[#allocation2 + $0x48] sm:$0xff] 0.0
    %35 = vst [vmem:[#allocation2 + $0x50] sm:$0xff] 0.0
    %36 = vst [vmem:[#allocation2 + $0x58] sm:$0xff] 0.0
    %37 = vst [vmem:[#allocation2 + $0x60] sm:$0xff] 0.0
    %38 = vst [vmem:[#allocation2 + $0x68] sm:$0xff] 0.0
    %39 = vst [vmem:[#allocation2 + $0x70] sm:$0xff] 0.0
    %40 = vst [vmem:[#allocation2 + $0x78] sm:$0xff] 0.0
  $region25: #{base_one_stage_forward.4} parent=0 // pred_fallthru
    _
  %s41 = smul.u32 0, 128
  %s42 = sshra.s32 %s41, 3
  %s43 = sand.u32 %s41, 7
  %s44 = smul.addr %s42, 4
  %s45 = scalar_lea.vmem %s2, %s44
  %v46 = vld [vmem:[%s45] sm:$0xf]
  %v47 = vld [vmem:[%s45 + $0x4] sm:$0xf]
  %v48 = vld [vmem:[%s45 + $0x8] sm:$0xf]
  %v49 = vld [vmem:[%s45 + $0xc] sm:$0xf]
  %v50 = vld [vmem:[%s45 + $0x10] sm:$0xf]
  %v51 = vld [vmem:[%s45 + $0x14] sm:$0xf]
  %v52 = vld [vmem:[%s45 + $0x18] sm:$0xf]
  %v53 = vld [vmem:[%s45 + $0x1c] sm:$0xf]
  %v54 = vld [vmem:[%s45 + $0x20] sm:$0xf]
  %v55 = vld [vmem:[%s45 + $0x24] sm:$0xf]
  %v56 = vld [vmem:[%s45 + $0x28] sm:$0xf]
  %v57 = vld [vmem:[%s45 + $0x2c] sm:$0xf]
  %v58 = vld [vmem:[%s45 + $0x30] sm:$0xf]
  %v59 = vld [vmem:[%s45 + $0x34] sm:$0xf]
  %v60 = vld [vmem:[%s45 + $0x38] sm:$0xf]
  %v61 = vld [vmem:[%s45 + $0x3c] sm:$0xf]
  %v62 = vld [vmem:[#allocation2] sm:$0xff]
  %v63 = vld [vmem:[#allocation2 + $0x8] sm:$0xff]
  %v64 = vld [vmem:[#allocation2 + $0x10] sm:$0xff]
  %v65 = vld [vmem:[#allocation2 + $0x18] sm:$0xff]
  %v66 = vld [vmem:[#allocation2 + $0x20] sm:$0xff]
  %v67 = vld [vmem:[#allocation2 + $0x28] sm:$0xff]
  %v68 = vld [vmem:[#allocation2 + $0x30] sm:$0xff]
  %v69 = vld [vmem:[#allocation2 + $0x38] sm:$0xff]
  %v70 = vld [vmem:[#allocation2 + $0x40] sm:$0xff]
  %v71 = vld [vmem:[#allocation2 + $0x48] sm:$0xff]
  %v72 = vld [vmem:[#allocation2 + $0x50] sm:$0xff]
  %v73 = vld [vmem:[#allocation2 + $0x58] sm:$0xff]
  %v74 = vld [vmem:[#allocation2 + $0x60] sm:$0xff]
  %v75 = vld [vmem:[#allocation2 + $0x68] sm:$0xff]
  %v76 = vld [vmem:[#allocation2 + $0x70] sm:$0xff]
  %v77 = vld [vmem:[#allocation2 + $0x78] sm:$0xff]
  %v78 = vld [vmem:[%s0] sm:$0xf]
  %v79 = vld [vmem:[%s0 + $0x4] sm:$0xf]
  %v80 = vld [vmem:[%s0 + $0x8] sm:$0xf]
  %v81 = vld [vmem:[%s0 + $0xc] sm:$0xf]
  %v82 = vld [vmem:[%s0 + $0x10] sm:$0xf]
  %v83 = vld [vmem:[%s0 + $0x14] sm:$0xf]
  %v84 = vld [vmem:[%s0 + $0x18] sm:$0xf]
  %v85 = vld [vmem:[%s0 + $0x1c] sm:$0xf]
  %v86 = vld [vmem:[%s0 + $0x20] sm:$0xf]
  %v87 = vld [vmem:[%s0 + $0x24] sm:$0xf]
  %v88 = vld [vmem:[%s0 + $0x28] sm:$0xf]
  %v89 = vld [vmem:[%s0 + $0x2c] sm:$0xf]
  %v90 = vld [vmem:[%s0 + $0x30] sm:$0xf]
  %v91 = vld [vmem:[%s0 + $0x34] sm:$0xf]
  %v92 = vld [vmem:[%s0 + $0x38] sm:$0xf]
  %v93 = vld [vmem:[%s0 + $0x3c] sm:$0xf]
  %v110 = vunpack.c.l.b16 %v78
  %v111 = vunpack.c.l.b16 %v79
  %v112 = vunpack.c.l.b16 %v80
  %v113 = vunpack.c.l.b16 %v81
  %v114 = vunpack.c.l.b16 %v82
  %v115 = vunpack.c.l.b16 %v83
  %v116 = vunpack.c.l.b16 %v84
  %v117 = vunpack.c.l.b16 %v85
  %v118 = vunpack.c.l.b16 %v86
  %v119 = vunpack.c.l.b16 %v87
  %v120 = vunpack.c.l.b16 %v88
  %v121 = vunpack.c.l.b16 %v89
  %v122 = vunpack.c.l.b16 %v90
  %v123 = vunpack.c.l.b16 %v91
  %v124 = vunpack.c.l.b16 %v92
  %v125 = vunpack.c.l.b16 %v93
  %v126 = vpack.c.b16 %v111, %v110
  %v127 = vpack.c.b16 %v113, %v112
  %v128 = vpack.c.b16 %v115, %v114
  %v129 = vpack.c.b16 %v117, %v116
  %v130 = vpack.c.b16 %v119, %v118
  %v131 = vpack.c.b16 %v121, %v120
  %v132 = vpack.c.b16 %v123, %v122
  %v133 = vpack.c.b16 %v125, %v124
  %v158 = vunpack.c.l.b16 %v46
  %v159 = vunpack.c.l.b16 %v47
  %v160 = vunpack.c.l.b16 %v48
  %v161 = vunpack.c.l.b16 %v49
  %v162 = vunpack.c.l.b16 %v50
  %v163 = vunpack.c.l.b16 %v51
  %v164 = vunpack.c.l.b16 %v52
  %v165 = vunpack.c.l.b16 %v53
  %v166 = vunpack.c.l.b16 %v54
  %v167 = vunpack.c.l.b16 %v55
  %v168 = vunpack.c.l.b16 %v56
  %v169 = vunpack.c.l.b16 %v57
  %v170 = vunpack.c.l.b16 %v58
  %v171 = vunpack.c.l.b16 %v59
  %v172 = vunpack.c.l.b16 %v60
  %v173 = vunpack.c.l.b16 %v61
  %v174 = vpack.c.b16 %v159, %v158
  %v175 = vpack.c.b16 %v161, %v160
  %v176 = vpack.c.b16 %v163, %v162
  %v177 = vpack.c.b16 %v165, %v164
  %v178 = vpack.c.b16 %v167, %v166
  %v179 = vpack.c.b16 %v169, %v168
  %v180 = vpack.c.b16 %v171, %v170
  %v181 = vpack.c.b16 %v173, %v172
  %190 = vmatprep.subr.bf16.mxu0 0
  %191 = vmatpush1.bf16.msra.mxu0 %v181
  %192 = vmatprep.subr.bf16.mxu0 0
  %193 = vmatpush1.bf16.msra.mxu0 %v180
  %194 = vmatprep.subr.bf16.mxu0 0
  %195 = vmatpush1.bf16.msra.mxu0 %v179
  %196 = vmatprep.subr.bf16.mxu0 0
  %197 = vmatpush1.bf16.msra.mxu0 %v178
  %198 = vmatprep.subr.bf16.mxu0 0
  %199 = vmatpush1.bf16.msra.mxu0 %v177
  %200 = vmatprep.subr.bf16.mxu0 0
  %201 = vmatpush1.bf16.msra.mxu0 %v176
  %202 = vmatprep.subr.bf16.mxu0 0
  %203 = vmatpush1.bf16.msra.mxu0 %v175
  %204 = vmatprep.subr.bf16.mxu0 0
  %205 = vmatpush1.bf16.msra.mxu0 %v174
  %206 = vmatprep.subr.bf16.mxu0 0
  %207 = vmatpush2.bf16.msra.mxu0 0
  %208 = vmatprep.subr.bf16.mxu0 0
  %209 = vmatpush2.bf16.msra.mxu0 0
  %210 = vmatprep.subr.bf16.mxu0 0
  %211 = vmatpush2.bf16.msra.mxu0 0
  %212 = vmatprep.subr.bf16.mxu0 0
  %213 = vmatpush2.bf16.msra.mxu0 0
  %214 = vmatprep.subr.bf16.mxu0 0
  %215 = vmatpush2.bf16.msra.mxu0 0
  %216 = vmatprep.subr.bf16.mxu0 0
  %217 = vmatpush2.bf16.msra.mxu0 0
  %218 = vmatprep.subr.bf16.mxu0 0
  %219 = vmatpush2.bf16.msra.mxu0 0
  %220 = vmatprep.subr.bf16.mxu0 0
  %221 = vmatpush2.bf16.msra.mxu0 0
  %222 = vmatprep.mubr.bf16.mxu0 0
  %223 = vmatmul.mubr.bf16.gmra.mxu0 %v126
  %v224 = vpop.f32.mrf.mxu0
  %v225 = vadd.f32 0.0, %v224
  %v226 = vpop.f32.mrf.mxu0
  %v227 = vpop.f32.mrf.mxu0
  %v228 = vadd.f32 0.0, %v227
  %v229 = vpop.f32.mrf.mxu0
  %230 = vmatprep.mubr.bf16.mxu0 0
  %231 = vmatmul.mubr.bf16.gmra.mxu0 %v127
  %v232 = vpop.f32.mrf.mxu0
  %v233 = vadd.f32 0.0, %v232
  %v234 = vpop.f32.mrf.mxu0
  %v235 = vpop.f32.mrf.mxu0
  %v236 = vadd.f32 0.0, %v235
  %v237 = vpop.f32.mrf.mxu0
  %238 = vmatprep.mubr.bf16.mxu0 0
  %239 = vmatmul.mubr.bf16.gmra.mxu0 %v128
  %v240 = vpop.f32.mrf.mxu0
  %v241 = vadd.f32 0.0, %v240
  %v242 = vpop.f32.mrf.mxu0
  %v243 = vpop.f32.mrf.mxu0
  %v244 = vadd.f32 0.0, %v243
  %v245 = vpop.f32.mrf.mxu0
  %246 = vmatprep.mubr.bf16.mxu0 0
  %247 = vmatmul.mubr.bf16.gmra.mxu0 %v129
  %v248 = vpop.f32.mrf.mxu0
  %v249 = vadd.f32 0.0, %v248
  %v250 = vpop.f32.mrf.mxu0
  %v251 = vpop.f32.mrf.mxu0
  %v252 = vadd.f32 0.0, %v251
  %v253 = vpop.f32.mrf.mxu0
  %254 = vmatprep.mubr.bf16.mxu0 0
  %255 = vmatmul.mubr.bf16.gmra.mxu0 %v130
  %v256 = vpop.f32.mrf.mxu0
  %v257 = vadd.f32 0.0, %v256
  %v258 = vpop.f32.mrf.mxu0
  %v259 = vpop.f32.mrf.mxu0
  %v260 = vadd.f32 0.0, %v259
  %v261 = vpop.f32.mrf.mxu0
  %262 = vmatprep.mubr.bf16.mxu0 0
  %263 = vmatmul.mubr.bf16.gmra.mxu0 %v131
  %v264 = vpop.f32.mrf.mxu0
  %v265 = vadd.f32 0.0, %v264
  %v266 = vpop.f32.mrf.mxu0
  %v267 = vpop.f32.mrf.mxu0
  %v268 = vadd.f32 0.0, %v267
  %v269 = vpop.f32.mrf.mxu0
  %270 = vmatprep.mubr.bf16.mxu0 0
  %271 = vmatmul.mubr.bf16.gmra.mxu0 %v132
  %v272 = vpop.f32.mrf.mxu0
  %v273 = vadd.f32 0.0, %v272
  %v274 = vpop.f32.mrf.mxu0
  %v275 = vpop.f32.mrf.mxu0
  %v276 = vadd.f32 0.0, %v275
  %v277 = vpop.f32.mrf.mxu0
  %278 = vmatprep.mubr.bf16.mxu0 0
  %279 = vmatmul.mubr.bf16.gmra.mxu0 %v133
  %v280 = vpop.f32.mrf.mxu0
  %v281 = vadd.f32 0.0, %v280
  %v282 = vpop.f32.mrf.mxu0
  %v283 = vpop.f32.mrf.mxu0
  %v284 = vadd.f32 0.0, %v283
  %v285 = vpop.f32.mrf.mxu0
  %286 = vdwg.mxu0
  %v287 = vadd.f32 %v62, %v225
  %v288 = vadd.f32 %v63, %v228
  %v289 = vadd.f32 %v64, %v233
  %v290 = vadd.f32 %v65, %v236
  %v291 = vadd.f32 %v66, %v241
  %v292 = vadd.f32 %v67, %v244
  %v293 = vadd.f32 %v68, %v249
  %v294 = vadd.f32 %v69, %v252
  %v295 = vadd.f32 %v70, %v257
  %v296 = vadd.f32 %v71, %v260
  %v297 = vadd.f32 %v72, %v265
  %v298 = vadd.f32 %v73, %v268
  %v299 = vadd.f32 %v74, %v273
  %v300 = vadd.f32 %v75, %v276
  %v301 = vadd.f32 %v76, %v281
  %v302 = vadd.f32 %v77, %v284
  %303 = vst [vmem:[#allocation2] sm:$0xff] %v287
  %304 = vst [vmem:[#allocation2 + $0x8] sm:$0xff] %v288
  %305 = vst [vmem:[#allocation2 + $0x10] sm:$0xff] %v289
  %306 = vst [vmem:[#allocation2 + $0x18] sm:$0xff] %v290
  %307 = vst [vmem:[#allocation2 + $0x20] sm:$0xff] %v291
  %308 = vst [vmem:[#allocation2 + $0x28] sm:$0xff] %v292
  %309 = vst [vmem:[#allocation2 + $0x30] sm:$0xff] %v293
  %310 = vst [vmem:[#allocation2 + $0x38] sm:$0xff] %v294
  %311 = vst [vmem:[#allocation2 + $0x40] sm:$0xff] %v295
  %312 = vst [vmem:[#allocation2 + $0x48] sm:$0xff] %v296
  %313 = vst [vmem:[#allocation2 + $0x50] sm:$0xff] %v297
  %314 = vst [vmem:[#allocation2 + $0x58] sm:$0xff] %v298
  %315 = vst [vmem:[#allocation2 + $0x60] sm:$0xff] %v299
  %316 = vst [vmem:[#allocation2 + $0x68] sm:$0xff] %v300
  %317 = vst [vmem:[#allocation2 + $0x70] sm:$0xff] %v301
  %318 = vst [vmem:[#allocation2 + $0x78] sm:$0xff] %v302
  // Predicated region
  $region26: #{base_one_stage_forward.4} parent=0 // pred_check
    %p319 = pneg %p21
  $region27: #{base_one_stage_forward.4} parent=0 // pred_check_branch
    %321 = sbr.rel (%p319) target = $region29
  $region28: #{base_one_stage_forward.4} parent=0 // pred_region
    %v322 = vld [vmem:[%s1] sm:$0xff]
    %v323 = vld [vmem:[%s1 + $0x8] sm:$0xff]
    %v324 = vld [vmem:[%s1 + $0x10] sm:$0xff]
    %v325 = vld [vmem:[%s1 + $0x18] sm:$0xff]
    %v326 = vld [vmem:[%s1 + $0x20] sm:$0xff]
    %v327 = vld [vmem:[%s1 + $0x28] sm:$0xff]
    %v328 = vld [vmem:[%s1 + $0x30] sm:$0xff]
    %v329 = vld [vmem:[%s1 + $0x38] sm:$0xff]
    %v330 = vld [vmem:[%s1 + $0x40] sm:$0xff]
    %v331 = vld [vmem:[%s1 + $0x48] sm:$0xff]
    %v332 = vld [vmem:[%s1 + $0x50] sm:$0xff]
    %v333 = vld [vmem:[%s1 + $0x58] sm:$0xff]
    %v334 = vld [vmem:[%s1 + $0x60] sm:$0xff]
    %v335 = vld [vmem:[%s1 + $0x68] sm:$0xff]
    %v336 = vld [vmem:[%s1 + $0x70] sm:$0xff]
    %v337 = vld [vmem:[%s1 + $0x78] sm:$0xff]
    %v338 = vld [vmem:[#allocation2] sm:$0xff]
    %v339 = vld [vmem:[#allocation2 + $0x8] sm:$0xff]
    %v340 = vld [vmem:[#allocation2 + $0x10] sm:$0xff]
    %v341 = vld [vmem:[#allocation2 + $0x18] sm:$0xff]
    %v342 = vld [vmem:[#allocation2 + $0x20] sm:$0xff]
    %v343 = vld [vmem:[#allocation2 + $0x28] sm:$0xff]
    %v344 = vld [vmem:[#allocation2 + $0x30] sm:$0xff]
    %v345 = vld [vmem:[#allocation2 + $0x38] sm:$0xff]
    %v346 = vld [vmem:[#allocation2 + $0x40] sm:$0xff]
    %v347 = vld [vmem:[#allocation2 + $0x48] sm:$0xff]
    %v348 = vld [vmem:[#allocation2 + $0x50] sm:$0xff]
    %v349 = vld [vmem:[#allocation2 + $0x58] sm:$0xff]
    %v350 = vld [vmem:[#allocation2 + $0x60] sm:$0xff]
    %v351 = vld [vmem:[#allocation2 + $0x68] sm:$0xff]
    %v352 = vld [vmem:[#allocation2 + $0x70] sm:$0xff]
    %v353 = vld [vmem:[#allocation2 + $0x78] sm:$0xff]
    %355 = vset.pattern.permute.xlu0 0
    %356 = vperm.xlu0 %355, %v322
    %v357 = vpop.permute.xlu0 %356
    %360 = vset.pattern.permute.xlu0 0
    %361 = vperm.xlu0 %360, %v323
    %v362 = vpop.permute.xlu0 %361
    %365 = vset.pattern.permute.xlu0 0
    %366 = vperm.xlu0 %365, %v324
    %v367 = vpop.permute.xlu0 %366
    %370 = vset.pattern.permute.xlu0 0
    %371 = vperm.xlu0 %370, %v325
    %v372 = vpop.permute.xlu0 %371
    %375 = vset.pattern.permute.xlu0 0
    %376 = vperm.xlu0 %375, %v326
    %v377 = vpop.permute.xlu0 %376
    %380 = vset.pattern.permute.xlu0 0
    %381 = vperm.xlu0 %380, %v327
    %v382 = vpop.permute.xlu0 %381
    %385 = vset.pattern.permute.xlu0 0
    %386 = vperm.xlu0 %385, %v328
    %v387 = vpop.permute.xlu0 %386
    %390 = vset.pattern.permute.xlu0 0
    %391 = vperm.xlu0 %390, %v329
    %v392 = vpop.permute.xlu0 %391
    %395 = vset.pattern.permute.xlu0 0
    %396 = vperm.xlu0 %395, %v330
    %v397 = vpop.permute.xlu0 %396
    %400 = vset.pattern.permute.xlu0 0
    %401 = vperm.xlu0 %400, %v331
    %v402 = vpop.permute.xlu0 %401
    %405 = vset.pattern.permute.xlu0 0
    %406 = vperm.xlu0 %405, %v332
    %v407 = vpop.permute.xlu0 %406
    %410 = vset.pattern.permute.xlu0 0
    %411 = vperm.xlu0 %410, %v333
    %v412 = vpop.permute.xlu0 %411
    %415 = vset.pattern.permute.xlu0 0
    %416 = vperm.xlu0 %415, %v334
    %v417 = vpop.permute.xlu0 %416
    %420 = vset.pattern.permute.xlu0 0
    %421 = vperm.xlu0 %420, %v335
    %v422 = vpop.permute.xlu0 %421
    %425 = vset.pattern.permute.xlu0 0
    %426 = vperm.xlu0 %425, %v336
    %v427 = vpop.permute.xlu0 %426
    %430 = vset.pattern.permute.xlu0 0
    %431 = vperm.xlu0 %430, %v337
    %v432 = vpop.permute.xlu0 %431
    %v434 = vmul.f32 %v338, %v357
    %v435 = vmul.f32 %v339, %v362
    %v436 = vmul.f32 %v340, %v367
    %v437 = vmul.f32 %v341, %v372
    %v438 = vmul.f32 %v342, %v377
    %v439 = vmul.f32 %v343, %v382
    %v440 = vmul.f32 %v344, %v387
    %v441 = vmul.f32 %v345, %v392
    %v442 = vmul.f32 %v346, %v397
    %v443 = vmul.f32 %v347, %v402
    %v444 = vmul.f32 %v348, %v407
    %v445 = vmul.f32 %v349, %v412
    %v446 = vmul.f32 %v350, %v417
    %v447 = vmul.f32 %v351, %v422
    %v448 = vmul.f32 %v352, %v427
    %v449 = vmul.f32 %v353, %v432
    %v450 = vpack.c.bf16 %v435, %v434
    %v451 = vpack.c.bf16 %v437, %v436
    %v452 = vpack.c.bf16 %v439, %v438
    %v453 = vpack.c.bf16 %v441, %v440
    %v454 = vpack.c.bf16 %v443, %v442
    %v455 = vpack.c.bf16 %v445, %v444
    %v456 = vpack.c.bf16 %v447, %v446
    %v457 = vpack.c.bf16 %v449, %v448
    %v458 = vld [vmem:[%s3] sm:$0xf]
    %v459 = vld [vmem:[%s3 + $0x4] sm:$0xf]
    %v460 = vld [vmem:[%s3 + $0x8] sm:$0xf]
    %v461 = vld [vmem:[%s3 + $0xc] sm:$0xf]
    %v462 = vld [vmem:[%s3 + $0x10] sm:$0xf]
    %v463 = vld [vmem:[%s3 + $0x14] sm:$0xf]
    %v464 = vld [vmem:[%s3 + $0x18] sm:$0xf]
    %v465 = vld [vmem:[%s3 + $0x1c] sm:$0xf]
    %v466 = vld [vmem:[%s3 + $0x20] sm:$0xf]
    %v467 = vld [vmem:[%s3 + $0x24] sm:$0xf]
    %v468 = vld [vmem:[%s3 + $0x28] sm:$0xf]
    %v469 = vld [vmem:[%s3 + $0x2c] sm:$0xf]
    %v470 = vld [vmem:[%s3 + $0x30] sm:$0xf]
    %v471 = vld [vmem:[%s3 + $0x34] sm:$0xf]
    %v472 = vld [vmem:[%s3 + $0x38] sm:$0xf]
    %v473 = vld [vmem:[%s3 + $0x3c] sm:$0xf]
    %v474 = vld [vmem:[%s4] sm:$0x1]
    %v476 = vlaneseq
    %v477 = vshrl.u32 %v476, 7
    %v478 = vsub.s32 0, %v477
    %v479 = vrot.slane %v474, %v478
    %v497 = vunpack.c.l.b16 %v458
    %v498 = vunpack.c.l.b16 %v459
    %v499 = vunpack.c.l.b16 %v460
    %v500 = vunpack.c.l.b16 %v461
    %v501 = vunpack.c.l.b16 %v462
    %v502 = vunpack.c.l.b16 %v463
    %v503 = vunpack.c.l.b16 %v464
    %v504 = vunpack.c.l.b16 %v465
    %v505 = vunpack.c.l.b16 %v466
    %v506 = vunpack.c.l.b16 %v467
    %v507 = vunpack.c.l.b16 %v468
    %v508 = vunpack.c.l.b16 %v469
    %v509 = vunpack.c.l.b16 %v470
    %v510 = vunpack.c.l.b16 %v471
    %v511 = vunpack.c.l.b16 %v472
    %v512 = vunpack.c.l.b16 %v473
    %v513 = vpack.c.b16 %v498, %v497
    %v514 = vpack.c.b16 %v500, %v499
    %v515 = vpack.c.b16 %v502, %v501
    %v516 = vpack.c.b16 %v504, %v503
    %v517 = vpack.c.b16 %v506, %v505
    %v518 = vpack.c.b16 %v508, %v507
    %v519 = vpack.c.b16 %v510, %v509
    %v520 = vpack.c.b16 %v512, %v511
    %529 = vmatprep.subr.bf16.mxu0 0
    %530 = vmatpush1.bf16.msra.mxu0 %v520
    %531 = vmatprep.subr.bf16.mxu0 0
    %532 = vmatpush1.bf16.msra.mxu0 %v519
    %533 = vmatprep.subr.bf16.mxu0 0
    %534 = vmatpush1.bf16.msra.mxu0 %v518
    %535 = vmatprep.subr.bf16.mxu0 0
    %536 = vmatpush1.bf16.msra.mxu0 %v517
    %537 = vmatprep.subr.bf16.mxu0 0
    %538 = vmatpush1.bf16.msra.mxu0 %v516
    %539 = vmatprep.subr.bf16.mxu0 0
    %540 = vmatpush1.bf16.msra.mxu0 %v515
    %541 = vmatprep.subr.bf16.mxu0 0
    %542 = vmatpush1.bf16.msra.mxu0 %v514
    %543 = vmatprep.subr.bf16.mxu0 0
    %544 = vmatpush1.bf16.msra.mxu0 %v513
    %545 = vmatprep.subr.bf16.mxu0 0
    %546 = vmatpush2.bf16.msra.mxu0 0
    %547 = vmatprep.subr.bf16.mxu0 0
    %548 = vmatpush2.bf16.msra.mxu0 0
    %549 = vmatprep.subr.bf16.mxu0 0
    %550 = vmatpush2.bf16.msra.mxu0 0
    %551 = vmatprep.subr.bf16.mxu0 0
    %552 = vmatpush2.bf16.msra.mxu0 0
    %553 = vmatprep.subr.bf16.mxu0 0
    %554 = vmatpush2.bf16.msra.mxu0 0
    %555 = vmatprep.subr.bf16.mxu0 0
    %556 = vmatpush2.bf16.msra.mxu0 0
    %557 = vmatprep.subr.bf16.mxu0 0
    %558 = vmatpush2.bf16.msra.mxu0 0
    %559 = vmatprep.subr.bf16.mxu0 0
    %560 = vmatpush2.bf16.msra.mxu0 0
    %561 = vmatprep.mubr.bf16.mxu0 0
    %562 = vmatmul.mubr.bf16.gmra.mxu0 %v450
    %v563 = vpop.f32.mrf.mxu0
    %v564 = vadd.f32 %v479, %v563
    %v565 = vpop.f32.mrf.mxu0
    %v566 = vpop.f32.mrf.mxu0
    %v567 = vadd.f32 %v479, %v566
    %v568 = vpop.f32.mrf.mxu0
    %569 = vmatprep.mubr.bf16.mxu0 0
    %570 = vmatmul.mubr.bf16.gmra.mxu0 %v451
    %v571 = vpop.f32.mrf.mxu0
    %v572 = vadd.f32 %v479, %v571
    %v573 = vpop.f32.mrf.mxu0
    %v574 = vpop.f32.mrf.mxu0
    %v575 = vadd.f32 %v479, %v574
    %v576 = vpop.f32.mrf.mxu0
    %577 = vmatprep.mubr.bf16.mxu0 0
    %578 = vmatmul.mubr.bf16.gmra.mxu0 %v452
    %v579 = vpop.f32.mrf.mxu0
    %v580 = vadd.f32 %v479, %v579
    %v581 = vpop.f32.mrf.mxu0
    %v582 = vpop.f32.mrf.mxu0
    %v583 = vadd.f32 %v479, %v582
    %v584 = vpop.f32.mrf.mxu0
    %585 = vmatprep.mubr.bf16.mxu0 0
    %586 = vmatmul.mubr.bf16.gmra.mxu0 %v453
    %v587 = vpop.f32.mrf.mxu0
    %v588 = vadd.f32 %v479, %v587
    %v589 = vpop.f32.mrf.mxu0
    %v590 = vpop.f32.mrf.mxu0
    %v591 = vadd.f32 %v479, %v590
    %v592 = vpop.f32.mrf.mxu0
    %593 = vmatprep.mubr.bf16.mxu0 0
    %594 = vmatmul.mubr.bf16.gmra.mxu0 %v454
    %v595 = vpop.f32.mrf.mxu0
    %v596 = vadd.f32 %v479, %v595
    %v597 = vpop.f32.mrf.mxu0
    %v598 = vpop.f32.mrf.mxu0
    %v599 = vadd.f32 %v479, %v598
    %v600 = vpop.f32.mrf.mxu0
    %601 = vmatprep.mubr.bf16.mxu0 0
    %602 = vmatmul.mubr.bf16.gmra.mxu0 %v455
    %v603 = vpop.f32.mrf.mxu0
    %v604 = vadd.f32 %v479, %v603
    %v605 = vpop.f32.mrf.mxu0
    %v606 = vpop.f32.mrf.mxu0
    %v607 = vadd.f32 %v479, %v606
    %v608 = vpop.f32.mrf.mxu0
    %609 = vmatprep.mubr.bf16.mxu0 0
    %610 = vmatmul.mubr.bf16.gmra.mxu0 %v456
    %v611 = vpop.f32.mrf.mxu0
    %v612 = vadd.f32 %v479, %v611
    %v613 = vpop.f32.mrf.mxu0
    %v614 = vpop.f32.mrf.mxu0
    %v615 = vadd.f32 %v479, %v614
    %v616 = vpop.f32.mrf.mxu0
    %617 = vmatprep.mubr.bf16.mxu0 0
    %618 = vmatmul.mubr.bf16.gmra.mxu0 %v457
    %v619 = vpop.f32.mrf.mxu0
    %v620 = vadd.f32 %v479, %v619
    %v621 = vpop.f32.mrf.mxu0
    %v622 = vpop.f32.mrf.mxu0
    %v623 = vadd.f32 %v479, %v622
    %v624 = vpop.f32.mrf.mxu0
    %625 = vdwg.mxu0
    %v626 = vmax.f32 %v564, 0.0
    %v627 = vmax.f32 %v567, 0.0
    %v628 = vmax.f32 %v572, 0.0
    %v629 = vmax.f32 %v575, 0.0
    %v630 = vmax.f32 %v580, 0.0
    %v631 = vmax.f32 %v583, 0.0
    %v632 = vmax.f32 %v588, 0.0
    %v633 = vmax.f32 %v591, 0.0
    %v634 = vmax.f32 %v596, 0.0
    %v635 = vmax.f32 %v599, 0.0
    %v636 = vmax.f32 %v604, 0.0
    %v637 = vmax.f32 %v607, 0.0
    %v638 = vmax.f32 %v612, 0.0
    %v639 = vmax.f32 %v615, 0.0
    %v640 = vmax.f32 %v620, 0.0
    %v641 = vmax.f32 %v623, 0.0
    %v642 = vpack.c.bf16 %v627, %v626
    %v643 = vpack.c.bf16 %v629, %v628
    %v644 = vpack.c.bf16 %v631, %v630
    %v645 = vpack.c.bf16 %v633, %v632
    %v646 = vpack.c.bf16 %v635, %v634
    %v647 = vpack.c.bf16 %v637, %v636
    %v648 = vpack.c.bf16 %v639, %v638
    %v649 = vpack.c.bf16 %v641, %v640
    %v658 = vunpack.c.l.b16 %v642
    %v659 = vunpack.c.h.b16 %v642
    %v660 = vunpack.c.l.b16 %v643
    %v661 = vunpack.c.h.b16 %v643
    %v662 = vunpack.c.l.b16 %v644
    %v663 = vunpack.c.h.b16 %v644
    %v664 = vunpack.c.l.b16 %v645
    %v665 = vunpack.c.h.b16 %v645
    %v666 = vunpack.c.l.b16 %v646
    %v667 = vunpack.c.h.b16 %v646
    %v668 = vunpack.c.l.b16 %v647
    %v669 = vunpack.c.h.b16 %v647
    %v670 = vunpack.c.l.b16 %v648
    %v671 = vunpack.c.h.b16 %v648
    %v672 = vunpack.c.l.b16 %v649
    %v673 = vunpack.c.h.b16 %v649
    %v674 = vpack.c.b16 %v658, %v658
    %v675 = vpack.c.b16 %v659, %v659
    %v676 = vpack.c.b16 %v660, %v660
    %v677 = vpack.c.b16 %v661, %v661
    %v678 = vpack.c.b16 %v662, %v662
    %v679 = vpack.c.b16 %v663, %v663
    %v680 = vpack.c.b16 %v664, %v664
    %v681 = vpack.c.b16 %v665, %v665
    %v682 = vpack.c.b16 %v666, %v666
    %v683 = vpack.c.b16 %v667, %v667
    %v684 = vpack.c.b16 %v668, %v668
    %v685 = vpack.c.b16 %v669, %v669
    %v686 = vpack.c.b16 %v670, %v670
    %v687 = vpack.c.b16 %v671, %v671
    %v688 = vpack.c.b16 %v672, %v672
    %v689 = vpack.c.b16 %v673, %v673
    %706 = vst [vmem:[%s5] sm:$0xf] %v674
    %707 = vst [vmem:[%s5 + $0x4] sm:$0xf] %v675
    %708 = vst [vmem:[%s5 + $0x8] sm:$0xf] %v676
    %709 = vst [vmem:[%s5 + $0xc] sm:$0xf] %v677
    %710 = vst [vmem:[%s5 + $0x10] sm:$0xf] %v678
    %711 = vst [vmem:[%s5 + $0x14] sm:$0xf] %v679
    %712 = vst [vmem:[%s5 + $0x18] sm:$0xf] %v680
    %713 = vst [vmem:[%s5 + $0x1c] sm:$0xf] %v681
    %714 = vst [vmem:[%s5 + $0x20] sm:$0xf] %v682
    %715 = vst [vmem:[%s5 + $0x24] sm:$0xf] %v683
    %716 = vst [vmem:[%s5 + $0x28] sm:$0xf] %v684
    %717 = vst [vmem:[%s5 + $0x2c] sm:$0xf] %v685
    %718 = vst [vmem:[%s5 + $0x30] sm:$0xf] %v686
    %719 = vst [vmem:[%s5 + $0x34] sm:$0xf] %v687
    %720 = vst [vmem:[%s5 + $0x38] sm:$0xf] %v688
    %721 = vst [vmem:[%s5 + $0x3c] sm:$0xf] %v689
  $region29: #{base_one_stage_forward.4} parent=0 // pred_fallthru
    _
  // Predicated region
  $region30: #{base_one_stage_forward.4} parent=0 // pred_check
    _
  $region31: #{base_one_stage_forward.4} parent=0 // pred_check_branch
    %723 = sbr.rel (0) target = $region33
  $region32: #{base_one_stage_forward.4} parent=0 // pred_region
    _
  $region33: #{base_one_stage_forward.4} parent=0 // pred_fallthru
    _
  // Predicated region
  $region34: #{base_one_stage_forward.4} parent=0 // pred_check
    _
  $region35: #{base_one_stage_forward.4} parent=0 // pred_check_branch
    %725 = sbr.rel (0) target = $region37
  $region36: #{base_one_stage_forward.4} parent=0 // pred_region
    _
  $region37: #{base_one_stage_forward.4} parent=0 // pred_fallthru
    _

// kernel: base_one_stage_forward.3
$region0: #{base_one_stage_forward.3}
  #allocation0 [shape = 'u32[]', space=smem, size = 0x4, offset = 0x4, fixed_abs, tag = 'smem constant byte address 0x4 - core index']
  #allocation1 [shape = 'u32[144,128]{1,0:T(1,128)}', space=vmem, size = 0x12000, scoped, tag = 'internal scratch']
  #allocation2 [shape = 'f32[128,128]{1,0:T(8,128)}', space=vmem, size = 0x10000, scoped, tag = 'scratch operand']
  %s0 = inlined_call_operand.vmem [shape: bf16[128,128], index: 0, kind: input, shape index: {}]
  %s1 = inlined_call_operand.vmem [shape: f32[128,1], index: 1, kind: input, shape index: {}]
  %s2 = inlined_call_operand.vmem [shape: bf16[128,128], index: 2, kind: input, shape index: {}]
  %s3 = inlined_call_operand.vmem [shape: bf16[128,128], index: 3, kind: input, shape index: {}]
  %s4 = inlined_call_operand.vmem [shape: f32[1,128], index: 4, kind: input, shape index: {}]
  %s5 = inlined_call_operand.vmem [shape: bf16[128,128], index: 5, kind: output, shape index: {}]
  %s6 = sld [smem:[#allocation0]]
  $region38: #{base_one_stage_forward.3} parent=0
    _
  %s8 = ssub.s32 1, %s6
  %s9 = scalar_select 0, %s8, %s6
  // Predicated region
  $region2: #{base_one_stage_forward.3} parent=0 // pred_check
    _
  $region3: #{base_one_stage_forward.3} parent=0 // pred_check_branch
    %11 = sbr.rel (0) target = $region5
  $region4: #{base_one_stage_forward.3} parent=0 // pred_region
    _
  $region5: #{base_one_stage_forward.3} parent=0 // pred_fallthru
    _
  // Predicated region
  $region6: #{base_one_stage_forward.3} parent=0 // pred_check
    _
  $region7: #{base_one_stage_forward.3} parent=0 // pred_check_branch
    %13 = sbr.rel (0) target = $region9
  $region8: #{base_one_stage_forward.3} parent=0 // pred_region
    _
  $region9: #{base_one_stage_forward.3} parent=0 // pred_fallthru
    _
  // Predicated region
  $region10: #{base_one_stage_forward.3} parent=0 // pred_check
    _
  $region11: #{base_one_stage_forward.3} parent=0 // pred_check_branch
    %15 = sbr.rel (0) target = $region13
  $region12: #{base_one_stage_forward.3} parent=0 // pred_region
    _
  $region13: #{base_one_stage_forward.3} parent=0 // pred_fallthru
    _
  // Predicated region
  $region14: #{base_one_stage_forward.3} parent=0 // pred_check
    _
  $region15: #{base_one_stage_forward.3} parent=0 // pred_check_branch
    %17 = sbr.rel (0) target = $region17
  $region16: #{base_one_stage_forward.3} parent=0 // pred_region
    _
  $region17: #{base_one_stage_forward.3} parent=0 // pred_fallthru
    _
  // Predicated region
  $region18: #{base_one_stage_forward.3} parent=0 // pred_check
    _
  $region19: #{base_one_stage_forward.3} parent=0 // pred_check_branch
    %19 = sbr.rel (0) target = $region21
  $region20: #{base_one_stage_forward.3} parent=0 // pred_region
    _
  $region21: #{base_one_stage_forward.3} parent=0 // pred_fallthru
    _
  %p21 = scmp.eq.s32.totalorder 0, 0
  // Predicated region
  $region22: #{base_one_stage_forward.3} parent=0 // pred_check
    %p22 = pneg %p21
  $region23: #{base_one_stage_forward.3} parent=0 // pred_check_branch
    %24 = sbr.rel (%p22) target = $region25
  $region24: #{base_one_stage_forward.3} parent=0 // pred_region
    %25 = vst [vmem:[#allocation2] sm:$0xff] 0.0
    %26 = vst [vmem:[#allocation2 + $0x8] sm:$0xff] 0.0
    %27 = vst [vmem:[#allocation2 + $0x10] sm:$0xff] 0.0
    %28 = vst [vmem:[#allocation2 + $0x18] sm:$0xff] 0.0
    %29 = vst [vmem:[#allocation2 + $0x20] sm:$0xff] 0.0
    %30 = vst [vmem:[#allocation2 + $0x28] sm:$0xff] 0.0
    %31 = vst [vmem:[#allocation2 + $0x30] sm:$0xff] 0.0
    %32 = vst [vmem:[#allocation2 + $0x38] sm:$0xff] 0.0
    %33 = vst [vmem:[#allocation2 + $0x40] sm:$0xff] 0.0
    %34 = vst [vmem:[#allocation2 + $0x48] sm:$0xff] 0.0
    %35 = vst [vmem:[#allocation2 + $0x50] sm:$0xff] 0.0
    %36 = vst [vmem:[#allocation2 + $0x58] sm:$0xff] 0.0
    %37 = vst [vmem:[#allocation2 + $0x60] sm:$0xff] 0.0
    %38 = vst [vmem:[#allocation2 + $0x68] sm:$0xff] 0.0
    %39 = vst [vmem:[#allocation2 + $0x70] sm:$0xff] 0.0
    %40 = vst [vmem:[#allocation2 + $0x78] sm:$0xff] 0.0
  $region25: #{base_one_stage_forward.3} parent=0 // pred_fallthru
    _
  %s41 = smul.u32 0, 128
  %s42 = sshra.s32 %s41, 3
  %s43 = sand.u32 %s41, 7
  %s44 = smul.addr %s42, 4
  %s45 = scalar_lea.vmem %s2, %s44
  %v46 = vld [vmem:[%s45] sm:$0xf]
  %v47 = vld [vmem:[%s45 + $0x4] sm:$0xf]
  %v48 = vld [vmem:[%s45 + $0x8] sm:$0xf]
  %v49 = vld [vmem:[%s45 + $0xc] sm:$0xf]
  %v50 = vld [vmem:[%s45 + $0x10] sm:$0xf]
  %v51 = vld [vmem:[%s45 + $0x14] sm:$0xf]
  %v52 = vld [vmem:[%s45 + $0x18] sm:$0xf]
  %v53 = vld [vmem:[%s45 + $0x1c] sm:$0xf]
  %v54 = vld [vmem:[%s45 + $0x20] sm:$0xf]
  %v55 = vld [vmem:[%s45 + $0x24] sm:$0xf]
  %v56 = vld [vmem:[%s45 + $0x28] sm:$0xf]
  %v57 = vld [vmem:[%s45 + $0x2c] sm:$0xf]
  %v58 = vld [vmem:[%s45 + $0x30] sm:$0xf]
  %v59 = vld [vmem:[%s45 + $0x34] sm:$0xf]
  %v60 = vld [vmem:[%s45 + $0x38] sm:$0xf]
  %v61 = vld [vmem:[%s45 + $0x3c] sm:$0xf]
  %v62 = vld [vmem:[#allocation2] sm:$0xff]
  %v63 = vld [vmem:[#allocation2 + $0x8] sm:$0xff]
  %v64 = vld [vmem:[#allocation2 + $0x10] sm:$0xff]
  %v65 = vld [vmem:[#allocation2 + $0x18] sm:$0xff]
  %v66 = vld [vmem:[#allocation2 + $0x20] sm:$0xff]
  %v67 = vld [vmem:[#allocation2 + $0x28] sm:$0xff]
  %v68 = vld [vmem:[#allocation2 + $0x30] sm:$0xff]
  %v69 = vld [vmem:[#allocation2 + $0x38] sm:$0xff]
  %v70 = vld [vmem:[#allocation2 + $0x40] sm:$0xff]
  %v71 = vld [vmem:[#allocation2 + $0x48] sm:$0xff]
  %v72 = vld [vmem:[#allocation2 + $0x50] sm:$0xff]
  %v73 = vld [vmem:[#allocation2 + $0x58] sm:$0xff]
  %v74 = vld [vmem:[#allocation2 + $0x60] sm:$0xff]
  %v75 = vld [vmem:[#allocation2 + $0x68] sm:$0xff]
  %v76 = vld [vmem:[#allocation2 + $0x70] sm:$0xff]
  %v77 = vld [vmem:[#allocation2 + $0x78] sm:$0xff]
  %v78 = vld [vmem:[%s0] sm:$0xf]
  %v79 = vld [vmem:[%s0 + $0x4] sm:$0xf]
  %v80 = vld [vmem:[%s0 + $0x8] sm:$0xf]
  %v81 = vld [vmem:[%s0 + $0xc] sm:$0xf]
  %v82 = vld [vmem:[%s0 + $0x10] sm:$0xf]
  %v83 = vld [vmem:[%s0 + $0x14] sm:$0xf]
  %v84 = vld [vmem:[%s0 + $0x18] sm:$0xf]
  %v85 = vld [vmem:[%s0 + $0x1c] sm:$0xf]
  %v86 = vld [vmem:[%s0 + $0x20] sm:$0xf]
  %v87 = vld [vmem:[%s0 + $0x24] sm:$0xf]
  %v88 = vld [vmem:[%s0 + $0x28] sm:$0xf]
  %v89 = vld [vmem:[%s0 + $0x2c] sm:$0xf]
  %v90 = vld [vmem:[%s0 + $0x30] sm:$0xf]
  %v91 = vld [vmem:[%s0 + $0x34] sm:$0xf]
  %v92 = vld [vmem:[%s0 + $0x38] sm:$0xf]
  %v93 = vld [vmem:[%s0 + $0x3c] sm:$0xf]
  %v110 = vunpack.c.l.b16 %v78
  %v111 = vunpack.c.l.b16 %v79
  %v112 = vunpack.c.l.b16 %v80
  %v113 = vunpack.c.l.b16 %v81
  %v114 = vunpack.c.l.b16 %v82
  %v115 = vunpack.c.l.b16 %v83
  %v116 = vunpack.c.l.b16 %v84
  %v117 = vunpack.c.l.b16 %v85
  %v118 = vunpack.c.l.b16 %v86
  %v119 = vunpack.c.l.b16 %v87
  %v120 = vunpack.c.l.b16 %v88
  %v121 = vunpack.c.l.b16 %v89
  %v122 = vunpack.c.l.b16 %v90
  %v123 = vunpack.c.l.b16 %v91
  %v124 = vunpack.c.l.b16 %v92
  %v125 = vunpack.c.l.b16 %v93
  %v126 = vpack.c.b16 %v111, %v110
  %v127 = vpack.c.b16 %v113, %v112
  %v128 = vpack.c.b16 %v115, %v114
  %v129 = vpack.c.b16 %v117, %v116
  %v130 = vpack.c.b16 %v119, %v118
  %v131 = vpack.c.b16 %v121, %v120
  %v132 = vpack.c.b16 %v123, %v122
  %v133 = vpack.c.b16 %v125, %v124
  %v158 = vunpack.c.l.b16 %v46
  %v159 = vunpack.c.l.b16 %v47
  %v160 = vunpack.c.l.b16 %v48
  %v161 = vunpack.c.l.b16 %v49
  %v162 = vunpack.c.l.b16 %v50
  %v163 = vunpack.c.l.b16 %v51
  %v164 = vunpack.c.l.b16 %v52
  %v165 = vunpack.c.l.b16 %v53
  %v166 = vunpack.c.l.b16 %v54
  %v167 = vunpack.c.l.b16 %v55
  %v168 = vunpack.c.l.b16 %v56
  %v169 = vunpack.c.l.b16 %v57
  %v170 = vunpack.c.l.b16 %v58
  %v171 = vunpack.c.l.b16 %v59
  %v172 = vunpack.c.l.b16 %v60
  %v173 = vunpack.c.l.b16 %v61
  %v174 = vpack.c.b16 %v159, %v158
  %v175 = vpack.c.b16 %v161, %v160
  %v176 = vpack.c.b16 %v163, %v162
  %v177 = vpack.c.b16 %v165, %v164
  %v178 = vpack.c.b16 %v167, %v166
  %v179 = vpack.c.b16 %v169, %v168
  %v180 = vpack.c.b16 %v171, %v170
  %v181 = vpack.c.b16 %v173, %v172
  %190 = vmatprep.subr.bf16.mxu0 0
  %191 = vmatpush1.bf16.msra.mxu0 %v181
  %192 = vmatprep.subr.bf16.mxu0 0
  %193 = vmatpush1.bf16.msra.mxu0 %v180
  %194 = vmatprep.subr.bf16.mxu0 0
  %195 = vmatpush1.bf16.msra.mxu0 %v179
  %196 = vmatprep.subr.bf16.mxu0 0
  %197 = vmatpush1.bf16.msra.mxu0 %v178
  %198 = vmatprep.subr.bf16.mxu0 0
  %199 = vmatpush1.bf16.msra.mxu0 %v177
  %200 = vmatprep.subr.bf16.mxu0 0
  %201 = vmatpush1.bf16.msra.mxu0 %v176
  %202 = vmatprep.subr.bf16.mxu0 0
  %203 = vmatpush1.bf16.msra.mxu0 %v175
  %204 = vmatprep.subr.bf16.mxu0 0
  %205 = vmatpush1.bf16.msra.mxu0 %v174
  %206 = vmatprep.subr.bf16.mxu0 0
  %207 = vmatpush2.bf16.msra.mxu0 0
  %208 = vmatprep.subr.bf16.mxu0 0
  %209 = vmatpush2.bf16.msra.mxu0 0
  %210 = vmatprep.subr.bf16.mxu0 0
  %211 = vmatpush2.bf16.msra.mxu0 0
  %212 = vmatprep.subr.bf16.mxu0 0
  %213 = vmatpush2.bf16.msra.mxu0 0
  %214 = vmatprep.subr.bf16.mxu0 0
  %215 = vmatpush2.bf16.msra.mxu0 0
  %216 = vmatprep.subr.bf16.mxu0 0
  %217 = vmatpush2.bf16.msra.mxu0 0
  %218 = vmatprep.subr.bf16.mxu0 0
  %219 = vmatpush2.bf16.msra.mxu0 0
  %220 = vmatprep.subr.bf16.mxu0 0
  %221 = vmatpush2.bf16.msra.mxu0 0
  %222 = vmatprep.mubr.bf16.mxu0 0
  %223 = vmatmul.mubr.bf16.gmra.mxu0 %v126
  %v224 = vpop.f32.mrf.mxu0
  %v225 = vadd.f32 0.0, %v224
  %v226 = vpop.f32.mrf.mxu0
  %v227 = vpop.f32.mrf.mxu0
  %v228 = vadd.f32 0.0, %v227
  %v229 = vpop.f32.mrf.mxu0
  %230 = vmatprep.mubr.bf16.mxu0 0
  %231 = vmatmul.mubr.bf16.gmra.mxu0 %v127
  %v232 = vpop.f32.mrf.mxu0
  %v233 = vadd.f32 0.0, %v232
  %v234 = vpop.f32.mrf.mxu0
  %v235 = vpop.f32.mrf.mxu0
  %v236 = vadd.f32 0.0, %v235
  %v237 = vpop.f32.mrf.mxu0
  %238 = vmatprep.mubr.bf16.mxu0 0
  %239 = vmatmul.mubr.bf16.gmra.mxu0 %v128
  %v240 = vpop.f32.mrf.mxu0
  %v241 = vadd.f32 0.0, %v240
  %v242 = vpop.f32.mrf.mxu0
  %v243 = vpop.f32.mrf.mxu0
  %v244 = vadd.f32 0.0, %v243
  %v245 = vpop.f32.mrf.mxu0
  %246 = vmatprep.mubr.bf16.mxu0 0
  %247 = vmatmul.mubr.bf16.gmra.mxu0 %v129
  %v248 = vpop.f32.mrf.mxu0
  %v249 = vadd.f32 0.0, %v248
  %v250 = vpop.f32.mrf.mxu0
  %v251 = vpop.f32.mrf.mxu0
  %v252 = vadd.f32 0.0, %v251
  %v253 = vpop.f32.mrf.mxu0
  %254 = vmatprep.mubr.bf16.mxu0 0
  %255 = vmatmul.mubr.bf16.gmra.mxu0 %v130
  %v256 = vpop.f32.mrf.mxu0
  %v257 = vadd.f32 0.0, %v256
  %v258 = vpop.f32.mrf.mxu0
  %v259 = vpop.f32.mrf.mxu0
  %v260 = vadd.f32 0.0, %v259
  %v261 = vpop.f32.mrf.mxu0
  %262 = vmatprep.mubr.bf16.mxu0 0
  %263 = vmatmul.mubr.bf16.gmra.mxu0 %v131
  %v264 = vpop.f32.mrf.mxu0
  %v265 = vadd.f32 0.0, %v264
  %v266 = vpop.f32.mrf.mxu0
  %v267 = vpop.f32.mrf.mxu0
  %v268 = vadd.f32 0.0, %v267
  %v269 = vpop.f32.mrf.mxu0
  %270 = vmatprep.mubr.bf16.mxu0 0
  %271 = vmatmul.mubr.bf16.gmra.mxu0 %v132
  %v272 = vpop.f32.mrf.mxu0
  %v273 = vadd.f32 0.0, %v272
  %v274 = vpop.f32.mrf.mxu0
  %v275 = vpop.f32.mrf.mxu0
  %v276 = vadd.f32 0.0, %v275
  %v277 = vpop.f32.mrf.mxu0
  %278 = vmatprep.mubr.bf16.mxu0 0
  %279 = vmatmul.mubr.bf16.gmra.mxu0 %v133
  %v280 = vpop.f32.mrf.mxu0
  %v281 = vadd.f32 0.0, %v280
  %v282 = vpop.f32.mrf.mxu0
  %v283 = vpop.f32.mrf.mxu0
  %v284 = vadd.f32 0.0, %v283
  %v285 = vpop.f32.mrf.mxu0
  %286 = vdwg.mxu0
  %v287 = vadd.f32 %v62, %v225
  %v288 = vadd.f32 %v63, %v228
  %v289 = vadd.f32 %v64, %v233
  %v290 = vadd.f32 %v65, %v236
  %v291 = vadd.f32 %v66, %v241
  %v292 = vadd.f32 %v67, %v244
  %v293 = vadd.f32 %v68, %v249
  %v294 = vadd.f32 %v69, %v252
  %v295 = vadd.f32 %v70, %v257
  %v296 = vadd.f32 %v71, %v260
  %v297 = vadd.f32 %v72, %v265
  %v298 = vadd.f32 %v73, %v268
  %v299 = vadd.f32 %v74, %v273
  %v300 = vadd.f32 %v75, %v276
  %v301 = vadd.f32 %v76, %v281
  %v302 = vadd.f32 %v77, %v284
  %303 = vst [vmem:[#allocation2] sm:$0xff] %v287
  %304 = vst [vmem:[#allocation2 + $0x8] sm:$0xff] %v288
  %305 = vst [vmem:[#allocation2 + $0x10] sm:$0xff] %v289
  %306 = vst [vmem:[#allocation2 + $0x18] sm:$0xff] %v290
  %307 = vst [vmem:[#allocation2 + $0x20] sm:$0xff] %v291
  %308 = vst [vmem:[#allocation2 + $0x28] sm:$0xff] %v292
  %309 = vst [vmem:[#allocation2 + $0x30] sm:$0xff] %v293
  %310 = vst [vmem:[#allocation2 + $0x38] sm:$0xff] %v294
  %311 = vst [vmem:[#allocation2 + $0x40] sm:$0xff] %v295
  %312 = vst [vmem:[#allocation2 + $0x48] sm:$0xff] %v296
  %313 = vst [vmem:[#allocation2 + $0x50] sm:$0xff] %v297
  %314 = vst [vmem:[#allocation2 + $0x58] sm:$0xff] %v298
  %315 = vst [vmem:[#allocation2 + $0x60] sm:$0xff] %v299
  %316 = vst [vmem:[#allocation2 + $0x68] sm:$0xff] %v300
  %317 = vst [vmem:[#allocation2 + $0x70] sm:$0xff] %v301
  %318 = vst [vmem:[#allocation2 + $0x78] sm:$0xff] %v302
  // Predicated region
  $region26: #{base_one_stage_forward.3} parent=0 // pred_check
    %p319 = pneg %p21
  $region27: #{base_one_stage_forward.3} parent=0 // pred_check_branch
    %321 = sbr.rel (%p319) target = $region29
  $region28: #{base_one_stage_forward.3} parent=0 // pred_region
    %v322 = vld [vmem:[%s1] sm:$0xff]
    %v323 = vld [vmem:[%s1 + $0x8] sm:$0xff]
    %v324 = vld [vmem:[%s1 + $0x10] sm:$0xff]
    %v325 = vld [vmem:[%s1 + $0x18] sm:$0xff]
    %v326 = vld [vmem:[%s1 + $0x20] sm:$0xff]
    %v327 = vld [vmem:[%s1 + $0x28] sm:$0xff]
    %v328 = vld [vmem:[%s1 + $0x30] sm:$0xff]
    %v329 = vld [vmem:[%s1 + $0x38] sm:$0xff]
    %v330 = vld [vmem:[%s1 + $0x40] sm:$0xff]
    %v331 = vld [vmem:[%s1 + $0x48] sm:$0xff]
    %v332 = vld [vmem:[%s1 + $0x50] sm:$0xff]
    %v333 = vld [vmem:[%s1 + $0x58] sm:$0xff]
    %v334 = vld [vmem:[%s1 + $0x60] sm:$0xff]
    %v335 = vld [vmem:[%s1 + $0x68] sm:$0xff]
    %v336 = vld [vmem:[%s1 + $0x70] sm:$0xff]
    %v337 = vld [vmem:[%s1 + $0x78] sm:$0xff]
    %v338 = vld [vmem:[#allocation2] sm:$0xff]
    %v339 = vld [vmem:[#allocation2 + $0x8] sm:$0xff]
    %v340 = vld [vmem:[#allocation2 + $0x10] sm:$0xff]
    %v341 = vld [vmem:[#allocation2 + $0x18] sm:$0xff]
    %v342 = vld [vmem:[#allocation2 + $0x20] sm:$0xff]
    %v343 = vld [vmem:[#allocation2 + $0x28] sm:$0xff]
    %v344 = vld [vmem:[#allocation2 + $0x30] sm:$0xff]
    %v345 = vld [vmem:[#allocation2 + $0x38] sm:$0xff]
    %v346 = vld [vmem:[#allocation2 + $0x40] sm:$0xff]
    %v347 = vld [vmem:[#allocation2 + $0x48] sm:$0xff]
    %v348 = vld [vmem:[#allocation2 + $0x50] sm:$0xff]
    %v349 = vld [vmem:[#allocation2 + $0x58] sm:$0xff]
    %v350 = vld [vmem:[#allocation2 + $0x60] sm:$0xff]
    %v351 = vld [vmem:[#allocation2 + $0x68] sm:$0xff]
    %v352 = vld [vmem:[#allocation2 + $0x70] sm:$0xff]
    %v353 = vld [vmem:[#allocation2 + $0x78] sm:$0xff]
    %355 = vset.pattern.permute.xlu0 0
    %356 = vperm.xlu0 %355, %v322
    %v357 = vpop.permute.xlu0 %356
    %360 = vset.pattern.permute.xlu0 0
    %361 = vperm.xlu0 %360, %v323
    %v362 = vpop.permute.xlu0 %361
    %365 = vset.pattern.permute.xlu0 0
    %366 = vperm.xlu0 %365, %v324
    %v367 = vpop.permute.xlu0 %366
    %370 = vset.pattern.permute.xlu0 0
    %371 = vperm.xlu0 %370, %v325
    %v372 = vpop.permute.xlu0 %371
    %375 = vset.pattern.permute.xlu0 0
    %376 = vperm.xlu0 %375, %v326
    %v377 = vpop.permute.xlu0 %376
    %380 = vset.pattern.permute.xlu0 0
    %381 = vperm.xlu0 %380, %v327
    %v382 = vpop.permute.xlu0 %381
    %385 = vset.pattern.permute.xlu0 0
    %386 = vperm.xlu0 %385, %v328
    %v387 = vpop.permute.xlu0 %386
    %390 = vset.pattern.permute.xlu0 0
    %391 = vperm.xlu0 %390, %v329
    %v392 = vpop.permute.xlu0 %391
    %395 = vset.pattern.permute.xlu0 0
    %396 = vperm.xlu0 %395, %v330
    %v397 = vpop.permute.xlu0 %396
    %400 = vset.pattern.permute.xlu0 0
    %401 = vperm.xlu0 %400, %v331
    %v402 = vpop.permute.xlu0 %401
    %405 = vset.pattern.permute.xlu0 0
    %406 = vperm.xlu0 %405, %v332
    %v407 = vpop.permute.xlu0 %406
    %410 = vset.pattern.permute.xlu0 0
    %411 = vperm.xlu0 %410, %v333
    %v412 = vpop.permute.xlu0 %411
    %415 = vset.pattern.permute.xlu0 0
    %416 = vperm.xlu0 %415, %v334
    %v417 = vpop.permute.xlu0 %416
    %420 = vset.pattern.permute.xlu0 0
    %421 = vperm.xlu0 %420, %v335
    %v422 = vpop.permute.xlu0 %421
    %425 = vset.pattern.permute.xlu0 0
    %426 = vperm.xlu0 %425, %v336
    %v427 = vpop.permute.xlu0 %426
    %430 = vset.pattern.permute.xlu0 0
    %431 = vperm.xlu0 %430, %v337
    %v432 = vpop.permute.xlu0 %431
    %v434 = vmul.f32 %v338, %v357
    %v435 = vmul.f32 %v339, %v362
    %v436 = vmul.f32 %v340, %v367
    %v437 = vmul.f32 %v341, %v372
    %v438 = vmul.f32 %v342, %v377
    %v439 = vmul.f32 %v343, %v382
    %v440 = vmul.f32 %v344, %v387
    %v441 = vmul.f32 %v345, %v392
    %v442 = vmul.f32 %v346, %v397
    %v443 = vmul.f32 %v347, %v402
    %v444 = vmul.f32 %v348, %v407
    %v445 = vmul.f32 %v349, %v412
    %v446 = vmul.f32 %v350, %v417
    %v447 = vmul.f32 %v351, %v422
    %v448 = vmul.f32 %v352, %v427
    %v449 = vmul.f32 %v353, %v432
    %v450 = vpack.c.bf16 %v435, %v434
    %v451 = vpack.c.bf16 %v437, %v436
    %v452 = vpack.c.bf16 %v439, %v438
    %v453 = vpack.c.bf16 %v441, %v440
    %v454 = vpack.c.bf16 %v443, %v442
    %v455 = vpack.c.bf16 %v445, %v444
    %v456 = vpack.c.bf16 %v447, %v446
    %v457 = vpack.c.bf16 %v449, %v448
    %v458 = vld [vmem:[%s3] sm:$0xf]
    %v459 = vld [vmem:[%s3 + $0x4] sm:$0xf]
    %v460 = vld [vmem:[%s3 + $0x8] sm:$0xf]
    %v461 = vld [vmem:[%s3 + $0xc] sm:$0xf]
    %v462 = vld [vmem:[%s3 + $0x10] sm:$0xf]
    %v463 = vld [vmem:[%s3 + $0x14] sm:$0xf]
    %v464 = vld [vmem:[%s3 + $0x18] sm:$0xf]
    %v465 = vld [vmem:[%s3 + $0x1c] sm:$0xf]
    %v466 = vld [vmem:[%s3 + $0x20] sm:$0xf]
    %v467 = vld [vmem:[%s3 + $0x24] sm:$0xf]
    %v468 = vld [vmem:[%s3 + $0x28] sm:$0xf]
    %v469 = vld [vmem:[%s3 + $0x2c] sm:$0xf]
    %v470 = vld [vmem:[%s3 + $0x30] sm:$0xf]
    %v471 = vld [vmem:[%s3 + $0x34] sm:$0xf]
    %v472 = vld [vmem:[%s3 + $0x38] sm:$0xf]
    %v473 = vld [vmem:[%s3 + $0x3c] sm:$0xf]
    %v474 = vld [vmem:[%s4] sm:$0x1]
    %v476 = vlaneseq
    %v477 = vshrl.u32 %v476, 7
    %v478 = vsub.s32 0, %v477
    %v479 = vrot.slane %v474, %v478
    %v497 = vunpack.c.l.b16 %v458
    %v498 = vunpack.c.l.b16 %v459
    %v499 = vunpack.c.l.b16 %v460
    %v500 = vunpack.c.l.b16 %v461
    %v501 = vunpack.c.l.b16 %v462
    %v502 = vunpack.c.l.b16 %v463
    %v503 = vunpack.c.l.b16 %v464
    %v504 = vunpack.c.l.b16 %v465
    %v505 = vunpack.c.l.b16 %v466
    %v506 = vunpack.c.l.b16 %v467
    %v507 = vunpack.c.l.b16 %v468
    %v508 = vunpack.c.l.b16 %v469
    %v509 = vunpack.c.l.b16 %v470
    %v510 = vunpack.c.l.b16 %v471
    %v511 = vunpack.c.l.b16 %v472
    %v512 = vunpack.c.l.b16 %v473
    %v513 = vpack.c.b16 %v498, %v497
    %v514 = vpack.c.b16 %v500, %v499
    %v515 = vpack.c.b16 %v502, %v501
    %v516 = vpack.c.b16 %v504, %v503
    %v517 = vpack.c.b16 %v506, %v505
    %v518 = vpack.c.b16 %v508, %v507
    %v519 = vpack.c.b16 %v510, %v509
    %v520 = vpack.c.b16 %v512, %v511
    %529 = vmatprep.subr.bf16.mxu0 0
    %530 = vmatpush1.bf16.msra.mxu0 %v520
    %531 = vmatprep.subr.bf16.mxu0 0
    %532 = vmatpush1.bf16.msra.mxu0 %v519
    %533 = vmatprep.subr.bf16.mxu0 0
    %534 = vmatpush1.bf16.msra.mxu0 %v518
    %535 = vmatprep.subr.bf16.mxu0 0
    %536 = vmatpush1.bf16.msra.mxu0 %v517
    %537 = vmatprep.subr.bf16.mxu0 0
    %538 = vmatpush1.bf16.msra.mxu0 %v516
    %539 = vmatprep.subr.bf16.mxu0 0
    %540 = vmatpush1.bf16.msra.mxu0 %v515
    %541 = vmatprep.subr.bf16.mxu0 0
    %542 = vmatpush1.bf16.msra.mxu0 %v514
    %543 = vmatprep.subr.bf16.mxu0 0
    %544 = vmatpush1.bf16.msra.mxu0 %v513
    %545 = vmatprep.subr.bf16.mxu0 0
    %546 = vmatpush2.bf16.msra.mxu0 0
    %547 = vmatprep.subr.bf16.mxu0 0
    %548 = vmatpush2.bf16.msra.mxu0 0
    %549 = vmatprep.subr.bf16.mxu0 0
    %550 = vmatpush2.bf16.msra.mxu0 0
    %551 = vmatprep.subr.bf16.mxu0 0
    %552 = vmatpush2.bf16.msra.mxu0 0
    %553 = vmatprep.subr.bf16.mxu0 0
    %554 = vmatpush2.bf16.msra.mxu0 0
    %555 = vmatprep.subr.bf16.mxu0 0
    %556 = vmatpush2.bf16.msra.mxu0 0
    %557 = vmatprep.subr.bf16.mxu0 0
    %558 = vmatpush2.bf16.msra.mxu0 0
    %559 = vmatprep.subr.bf16.mxu0 0
    %560 = vmatpush2.bf16.msra.mxu0 0
    %561 = vmatprep.mubr.bf16.mxu0 0
    %562 = vmatmul.mubr.bf16.gmra.mxu0 %v450
    %v563 = vpop.f32.mrf.mxu0
    %v564 = vadd.f32 %v479, %v563
    %v565 = vpop.f32.mrf.mxu0
    %v566 = vpop.f32.mrf.mxu0
    %v567 = vadd.f32 %v479, %v566
    %v568 = vpop.f32.mrf.mxu0
    %569 = vmatprep.mubr.bf16.mxu0 0
    %570 = vmatmul.mubr.bf16.gmra.mxu0 %v451
    %v571 = vpop.f32.mrf.mxu0
    %v572 = vadd.f32 %v479, %v571
    %v573 = vpop.f32.mrf.mxu0
    %v574 = vpop.f32.mrf.mxu0
    %v575 = vadd.f32 %v479, %v574
    %v576 = vpop.f32.mrf.mxu0
    %577 = vmatprep.mubr.bf16.mxu0 0
    %578 = vmatmul.mubr.bf16.gmra.mxu0 %v452
    %v579 = vpop.f32.mrf.mxu0
    %v580 = vadd.f32 %v479, %v579
    %v581 = vpop.f32.mrf.mxu0
    %v582 = vpop.f32.mrf.mxu0
    %v583 = vadd.f32 %v479, %v582
    %v584 = vpop.f32.mrf.mxu0
    %585 = vmatprep.mubr.bf16.mxu0 0
    %586 = vmatmul.mubr.bf16.gmra.mxu0 %v453
    %v587 = vpop.f32.mrf.mxu0
    %v588 = vadd.f32 %v479, %v587
    %v589 = vpop.f32.mrf.mxu0
    %v590 = vpop.f32.mrf.mxu0
    %v591 = vadd.f32 %v479, %v590
    %v592 = vpop.f32.mrf.mxu0
    %593 = vmatprep.mubr.bf16.mxu0 0
    %594 = vmatmul.mubr.bf16.gmra.mxu0 %v454
    %v595 = vpop.f32.mrf.mxu0
    %v596 = vadd.f32 %v479, %v595
    %v597 = vpop.f32.mrf.mxu0
    %v598 = vpop.f32.mrf.mxu0
    %v599 = vadd.f32 %v479, %v598
    %v600 = vpop.f32.mrf.mxu0
    %601 = vmatprep.mubr.bf16.mxu0 0
    %602 = vmatmul.mubr.bf16.gmra.mxu0 %v455
    %v603 = vpop.f32.mrf.mxu0
    %v604 = vadd.f32 %v479, %v603
    %v605 = vpop.f32.mrf.mxu0
    %v606 = vpop.f32.mrf.mxu0
    %v607 = vadd.f32 %v479, %v606
    %v608 = vpop.f32.mrf.mxu0
    %609 = vmatprep.mubr.bf16.mxu0 0
    %610 = vmatmul.mubr.bf16.gmra.mxu0 %v456
    %v611 = vpop.f32.mrf.mxu0
    %v612 = vadd.f32 %v479, %v611
    %v613 = vpop.f32.mrf.mxu0
    %v614 = vpop.f32.mrf.mxu0
    %v615 = vadd.f32 %v479, %v614
    %v616 = vpop.f32.mrf.mxu0
    %617 = vmatprep.mubr.bf16.mxu0 0
    %618 = vmatmul.mubr.bf16.gmra.mxu0 %v457
    %v619 = vpop.f32.mrf.mxu0
    %v620 = vadd.f32 %v479, %v619
    %v621 = vpop.f32.mrf.mxu0
    %v622 = vpop.f32.mrf.mxu0
    %v623 = vadd.f32 %v479, %v622
    %v624 = vpop.f32.mrf.mxu0
    %625 = vdwg.mxu0
    %v626 = vmax.f32 %v564, 0.0
    %v627 = vmax.f32 %v567, 0.0
    %v628 = vmax.f32 %v572, 0.0
    %v629 = vmax.f32 %v575, 0.0
    %v630 = vmax.f32 %v580, 0.0
    %v631 = vmax.f32 %v583, 0.0
    %v632 = vmax.f32 %v588, 0.0
    %v633 = vmax.f32 %v591, 0.0
    %v634 = vmax.f32 %v596, 0.0
    %v635 = vmax.f32 %v599, 0.0
    %v636 = vmax.f32 %v604, 0.0
    %v637 = vmax.f32 %v607, 0.0
    %v638 = vmax.f32 %v612, 0.0
    %v639 = vmax.f32 %v615, 0.0
    %v640 = vmax.f32 %v620, 0.0
    %v641 = vmax.f32 %v623, 0.0
    %v642 = vmul.f32 %v626, %v357
    %v643 = vmul.f32 %v627, %v362
    %v644 = vmul.f32 %v628, %v367
    %v645 = vmul.f32 %v629, %v372
    %v646 = vmul.f32 %v630, %v377
    %v647 = vmul.f32 %v631, %v382
    %v648 = vmul.f32 %v632, %v387
    %v649 = vmul.f32 %v633, %v392
    %v650 = vmul.f32 %v634, %v397
    %v651 = vmul.f32 %v635, %v402
    %v652 = vmul.f32 %v636, %v407
    %v653 = vmul.f32 %v637, %v412
    %v654 = vmul.f32 %v638, %v417
    %v655 = vmul.f32 %v639, %v422
    %v656 = vmul.f32 %v640, %v427
    %v657 = vmul.f32 %v641, %v432
    %v658 = vpack.c.bf16 %v643, %v642
    %v659 = vpack.c.bf16 %v645, %v644
    %v660 = vpack.c.bf16 %v647, %v646
    %v661 = vpack.c.bf16 %v649, %v648
    %v662 = vpack.c.bf16 %v651, %v650
    %v663 = vpack.c.bf16 %v653, %v652
    %v664 = vpack.c.bf16 %v655, %v654
    %v665 = vpack.c.bf16 %v657, %v656
    %v674 = vunpack.c.l.b16 %v658
    %v675 = vunpack.c.h.b16 %v658
    %v676 = vunpack.c.l.b16 %v659
    %v677 = vunpack.c.h.b16 %v659
    %v678 = vunpack.c.l.b16 %v660
    %v679 = vunpack.c.h.b16 %v660
    %v680 = vunpack.c.l.b16 %v661
    %v681 = vunpack.c.h.b16 %v661
    %v682 = vunpack.c.l.b16 %v662
    %v683 = vunpack.c.h.b16 %v662
    %v684 = vunpack.c.l.b16 %v663
    %v685 = vunpack.c.h.b16 %v663
    %v686 = vunpack.c.l.b16 %v664
    %v687 = vunpack.c.h.b16 %v664
    %v688 = vunpack.c.l.b16 %v665
    %v689 = vunpack.c.h.b16 %v665
    %v690 = vpack.c.b16 %v674, %v674
    %v691 = vpack.c.b16 %v675, %v675
    %v692 = vpack.c.b16 %v676, %v676
    %v693 = vpack.c.b16 %v677, %v677
    %v694 = vpack.c.b16 %v678, %v678
    %v695 = vpack.c.b16 %v679, %v679
    %v696 = vpack.c.b16 %v680, %v680
    %v697 = vpack.c.b16 %v681, %v681
    %v698 = vpack.c.b16 %v682, %v682
    %v699 = vpack.c.b16 %v683, %v683
    %v700 = vpack.c.b16 %v684, %v684
    %v701 = vpack.c.b16 %v685, %v685
    %v702 = vpack.c.b16 %v686, %v686
    %v703 = vpack.c.b16 %v687, %v687
    %v704 = vpack.c.b16 %v688, %v688
    %v705 = vpack.c.b16 %v689, %v689
    %722 = vst [vmem:[%s5] sm:$0xf] %v690
    %723 = vst [vmem:[%s5 + $0x4] sm:$0xf] %v691
    %724 = vst [vmem:[%s5 + $0x8] sm:$0xf] %v692
    %725 = vst [vmem:[%s5 + $0xc] sm:$0xf] %v693
    %726 = vst [vmem:[%s5 + $0x10] sm:$0xf] %v694
    %727 = vst [vmem:[%s5 + $0x14] sm:$0xf] %v695
    %728 = vst [vmem:[%s5 + $0x18] sm:$0xf] %v696
    %729 = vst [vmem:[%s5 + $0x1c] sm:$0xf] %v697
    %730 = vst [vmem:[%s5 + $0x20] sm:$0xf] %v698
    %731 = vst [vmem:[%s5 + $0x24] sm:$0xf] %v699
    %732 = vst [vmem:[%s5 + $0x28] sm:$0xf] %v700
    %733 = vst [vmem:[%s5 + $0x2c] sm:$0xf] %v701
    %734 = vst [vmem:[%s5 + $0x30] sm:$0xf] %v702
    %735 = vst [vmem:[%s5 + $0x34] sm:$0xf] %v703
    %736 = vst [vmem:[%s5 + $0x38] sm:$0xf] %v704
    %737 = vst [vmem:[%s5 + $0x3c] sm:$0xf] %v705
  $region29: #{base_one_stage_forward.3} parent=0 // pred_fallthru
    _
  // Predicated region
  $region30: #{base_one_stage_forward.3} parent=0 // pred_check
    _
  $region31: #{base_one_stage_forward.3} parent=0 // pred_check_branch
    %739 = sbr.rel (0) target = $region33
  $region32: #{base_one_stage_forward.3} parent=0 // pred_region
    _
  $region33: #{base_one_stage_forward.3} parent=0 // pred_fallthru
    _
  // Predicated region
  $region34: #{base_one_stage_forward.3} parent=0 // pred_check
    _
  $region35: #{base_one_stage_forward.3} parent=0 // pred_check_branch
    %741 = sbr.rel (0) target = $region37
  $region36: #{base_one_stage_forward.3} parent=0 // pred_region
    _
  $region37: #{base_one_stage_forward.3} parent=0 // pred_fallthru
    _

// kernel: base_one_stage_forward.5
$region0: #{base_one_stage_forward.5}
  #allocation0 [shape = 'u32[]', space=smem, size = 0x4, offset = 0x4, fixed_abs, tag = 'smem constant byte address 0x4 - core index']
  #allocation1 [shape = 'u32[144,128]{1,0:T(1,128)}', space=vmem, size = 0x12000, scoped, tag = 'internal scratch']
  #allocation2 [shape = 'f32[8,128]{1,0:T(8,128)}', space=vmem, size = 0x1000, scoped, tag = 'scratch operand']
  %s0 = inlined_call_operand.vmem [shape: bf16[8,128], index: 0, kind: input, shape index: {}]
  %s1 = inlined_call_operand.vmem [shape: bf16[128,128], index: 1, kind: input, shape index: {}]
  %s2 = inlined_call_operand.vmem [shape: bf16[128,128], index: 2, kind: input, shape index: {}]
  %s3 = inlined_call_operand.vmem [shape: f32[1,128], index: 3, kind: input, shape index: {}]
  %s4 = inlined_call_operand.vmem [shape: f32[8,128], index: 4, kind: output, shape index: {}]
  %s5 = sld [smem:[#allocation0]]
  $region34: #{base_one_stage_forward.5} parent=0
    _
  %s7 = ssub.s32 1, %s5
  %s8 = scalar_select 0, %s7, %s5
  // Predicated region
  $region2: #{base_one_stage_forward.5} parent=0 // pred_check
    _
  $region3: #{base_one_stage_forward.5} parent=0 // pred_check_branch
    %10 = sbr.rel (0) target = $region5
  $region4: #{base_one_stage_forward.5} parent=0 // pred_region
    _
  $region5: #{base_one_stage_forward.5} parent=0 // pred_fallthru
    _
  // Predicated region
  $region6: #{base_one_stage_forward.5} parent=0 // pred_check
    _
  $region7: #{base_one_stage_forward.5} parent=0 // pred_check_branch
    %12 = sbr.rel (0) target = $region9
  $region8: #{base_one_stage_forward.5} parent=0 // pred_region
    _
  $region9: #{base_one_stage_forward.5} parent=0 // pred_fallthru
    _
  // Predicated region
  $region10: #{base_one_stage_forward.5} parent=0 // pred_check
    _
  $region11: #{base_one_stage_forward.5} parent=0 // pred_check_branch
    %14 = sbr.rel (0) target = $region13
  $region12: #{base_one_stage_forward.5} parent=0 // pred_region
    _
  $region13: #{base_one_stage_forward.5} parent=0 // pred_fallthru
    _
  // Predicated region
  $region14: #{base_one_stage_forward.5} parent=0 // pred_check
    _
  $region15: #{base_one_stage_forward.5} parent=0 // pred_check_branch
    %16 = sbr.rel (0) target = $region17
  $region16: #{base_one_stage_forward.5} parent=0 // pred_region
    _
  $region17: #{base_one_stage_forward.5} parent=0 // pred_fallthru
    _
  %p18 = scmp.eq.s32.totalorder 0, 0
  // Predicated region
  $region18: #{base_one_stage_forward.5} parent=0 // pred_check
    %p19 = pneg %p18
  $region19: #{base_one_stage_forward.5} parent=0 // pred_check_branch
    %21 = sbr.rel (%p19) target = $region21
  $region20: #{base_one_stage_forward.5} parent=0 // pred_region
    %22 = vst [vmem:[#allocation2] sm:$0xff] 0.0
  $region21: #{base_one_stage_forward.5} parent=0 // pred_fallthru
    _
  %v23 = vld [vmem:[#allocation2] sm:$0xff]
  %v24 = vld [vmem:[%s0] sm:$0xf]
  %v25 = vld [vmem:[%s1] sm:$0xf]
  %v26 = vld [vmem:[%s1 + $0x4] sm:$0xf]
  %v27 = vld [vmem:[%s1 + $0x8] sm:$0xf]
  %v28 = vld [vmem:[%s1 + $0xc] sm:$0xf]
  %v29 = vld [vmem:[%s1 + $0x10] sm:$0xf]
  %v30 = vld [vmem:[%s1 + $0x14] sm:$0xf]
  %v31 = vld [vmem:[%s1 + $0x18] sm:$0xf]
  %v32 = vld [vmem:[%s1 + $0x1c] sm:$0xf]
  %v33 = vld [vmem:[%s1 + $0x20] sm:$0xf]
  %v34 = vld [vmem:[%s1 + $0x24] sm:$0xf]
  %v35 = vld [vmem:[%s1 + $0x28] sm:$0xf]
  %v36 = vld [vmem:[%s1 + $0x2c] sm:$0xf]
  %v37 = vld [vmem:[%s1 + $0x30] sm:$0xf]
  %v38 = vld [vmem:[%s1 + $0x34] sm:$0xf]
  %v39 = vld [vmem:[%s1 + $0x38] sm:$0xf]
  %v40 = vld [vmem:[%s1 + $0x3c] sm:$0xf]
  %v57 = vunpack.c.l.b16 %v25
  %v58 = vunpack.c.l.b16 %v26
  %v59 = vunpack.c.l.b16 %v27
  %v60 = vunpack.c.l.b16 %v28
  %v61 = vunpack.c.l.b16 %v29
  %v62 = vunpack.c.l.b16 %v30
  %v63 = vunpack.c.l.b16 %v31
  %v64 = vunpack.c.l.b16 %v32
  %v65 = vunpack.c.l.b16 %v33
  %v66 = vunpack.c.l.b16 %v34
  %v67 = vunpack.c.l.b16 %v35
  %v68 = vunpack.c.l.b16 %v36
  %v69 = vunpack.c.l.b16 %v37
  %v70 = vunpack.c.l.b16 %v38
  %v71 = vunpack.c.l.b16 %v39
  %v72 = vunpack.c.l.b16 %v40
  %v73 = vpack.c.b16 %v58, %v57
  %v74 = vpack.c.b16 %v60, %v59
  %v75 = vpack.c.b16 %v62, %v61
  %v76 = vpack.c.b16 %v64, %v63
  %v77 = vpack.c.b16 %v66, %v65
  %v78 = vpack.c.b16 %v68, %v67
  %v79 = vpack.c.b16 %v70, %v69
  %v80 = vpack.c.b16 %v72, %v71
  %89 = vmatprep.subr.bf16.mxu0 0
  %90 = vmatpush1.bf16.msra.mxu0 %v80
  %91 = vmatprep.subr.bf16.mxu0 0
  %92 = vmatpush1.bf16.msra.mxu0 %v79
  %93 = vmatprep.subr.bf16.mxu0 0
  %94 = vmatpush1.bf16.msra.mxu0 %v78
  %95 = vmatprep.subr.bf16.mxu0 0
  %96 = vmatpush1.bf16.msra.mxu0 %v77
  %97 = vmatprep.subr.bf16.mxu0 0
  %98 = vmatpush1.bf16.msra.mxu0 %v76
  %99 = vmatprep.subr.bf16.mxu0 0
  %100 = vmatpush1.bf16.msra.mxu0 %v75
  %101 = vmatprep.subr.bf16.mxu0 0
  %102 = vmatpush1.bf16.msra.mxu0 %v74
  %103 = vmatprep.subr.bf16.mxu0 0
  %104 = vmatpush1.bf16.msra.mxu0 %v73
  %105 = vmatprep.subr.bf16.mxu0 0
  %106 = vmatpush2.bf16.msra.mxu0 0
  %107 = vmatprep.subr.bf16.mxu0 0
  %108 = vmatpush2.bf16.msra.mxu0 0
  %109 = vmatprep.subr.bf16.mxu0 0
  %110 = vmatpush2.bf16.msra.mxu0 0
  %111 = vmatprep.subr.bf16.mxu0 0
  %112 = vmatpush2.bf16.msra.mxu0 0
  %113 = vmatprep.subr.bf16.mxu0 0
  %114 = vmatpush2.bf16.msra.mxu0 0
  %115 = vmatprep.subr.bf16.mxu0 0
  %116 = vmatpush2.bf16.msra.mxu0 0
  %117 = vmatprep.subr.bf16.mxu0 0
  %118 = vmatpush2.bf16.msra.mxu0 0
  %119 = vmatprep.subr.bf16.mxu0 0
  %120 = vmatpush2.bf16.msra.mxu0 0
  %121 = vmatprep.mubr.bf16.mxu0 0
  %122 = vmatmul.mubr.bf16.gmra.mxu0 %v24
  %v123 = vpop.f32.mrf.mxu0
  %v124 = vadd.f32 0.0, %v123
  %v125 = vpop.f32.mrf.mxu0
  %v126 = vpop.f32.mrf.mxu0
  %v127 = vpop.f32.mrf.mxu0
  %128 = vdwg.mxu0
  %v129 = vadd.f32 %v23, %v124
  %130 = vst [vmem:[#allocation2] sm:$0xff] %v129
  // Predicated region
  $region22: #{base_one_stage_forward.5} parent=0 // pred_check
    %p131 = pneg %p18
  $region23: #{base_one_stage_forward.5} parent=0 // pred_check_branch
    %133 = sbr.rel (%p131) target = $region25
  $region24: #{base_one_stage_forward.5} parent=0 // pred_region
    %v134 = vld [vmem:[#allocation2] sm:$0xff]
    %v135 = vpack.c.bf16 %v134, %v134
    %v136 = vld [vmem:[%s2] sm:$0xf]
    %v137 = vld [vmem:[%s2 + $0x4] sm:$0xf]
    %v138 = vld [vmem:[%s2 + $0x8] sm:$0xf]
    %v139 = vld [vmem:[%s2 + $0xc] sm:$0xf]
    %v140 = vld [vmem:[%s2 + $0x10] sm:$0xf]
    %v141 = vld [vmem:[%s2 + $0x14] sm:$0xf]
    %v142 = vld [vmem:[%s2 + $0x18] sm:$0xf]
    %v143 = vld [vmem:[%s2 + $0x1c] sm:$0xf]
    %v144 = vld [vmem:[%s2 + $0x20] sm:$0xf]
    %v145 = vld [vmem:[%s2 + $0x24] sm:$0xf]
    %v146 = vld [vmem:[%s2 + $0x28] sm:$0xf]
    %v147 = vld [vmem:[%s2 + $0x2c] sm:$0xf]
    %v148 = vld [vmem:[%s2 + $0x30] sm:$0xf]
    %v149 = vld [vmem:[%s2 + $0x34] sm:$0xf]
    %v150 = vld [vmem:[%s2 + $0x38] sm:$0xf]
    %v151 = vld [vmem:[%s2 + $0x3c] sm:$0xf]
    %v152 = vld [vmem:[%s3] sm:$0x1]
    %v154 = vlaneseq
    %v155 = vshrl.u32 %v154, 7
    %v156 = vsub.s32 0, %v155
    %v157 = vrot.slane %v152, %v156
    %v175 = vunpack.c.l.b16 %v136
    %v176 = vunpack.c.l.b16 %v137
    %v177 = vunpack.c.l.b16 %v138
    %v178 = vunpack.c.l.b16 %v139
    %v179 = vunpack.c.l.b16 %v140
    %v180 = vunpack.c.l.b16 %v141
    %v181 = vunpack.c.l.b16 %v142
    %v182 = vunpack.c.l.b16 %v143
    %v183 = vunpack.c.l.b16 %v144
    %v184 = vunpack.c.l.b16 %v145
    %v185 = vunpack.c.l.b16 %v146
    %v186 = vunpack.c.l.b16 %v147
    %v187 = vunpack.c.l.b16 %v148
    %v188 = vunpack.c.l.b16 %v149
    %v189 = vunpack.c.l.b16 %v150
    %v190 = vunpack.c.l.b16 %v151
    %v191 = vpack.c.b16 %v176, %v175
    %v192 = vpack.c.b16 %v178, %v177
    %v193 = vpack.c.b16 %v180, %v179
    %v194 = vpack.c.b16 %v182, %v181
    %v195 = vpack.c.b16 %v184, %v183
    %v196 = vpack.c.b16 %v186, %v185
    %v197 = vpack.c.b16 %v188, %v187
    %v198 = vpack.c.b16 %v190, %v189
    %207 = vmatprep.subr.bf16.mxu0 0
    %208 = vmatpush1.bf16.msra.mxu0 %v198
    %209 = vmatprep.subr.bf16.mxu0 0
    %210 = vmatpush1.bf16.msra.mxu0 %v197
    %211 = vmatprep.subr.bf16.mxu0 0
    %212 = vmatpush1.bf16.msra.mxu0 %v196
    %213 = vmatprep.subr.bf16.mxu0 0
    %214 = vmatpush1.bf16.msra.mxu0 %v195
    %215 = vmatprep.subr.bf16.mxu0 0
    %216 = vmatpush1.bf16.msra.mxu0 %v194
    %217 = vmatprep.subr.bf16.mxu0 0
    %218 = vmatpush1.bf16.msra.mxu0 %v193
    %219 = vmatprep.subr.bf16.mxu0 0
    %220 = vmatpush1.bf16.msra.mxu0 %v192
    %221 = vmatprep.subr.bf16.mxu0 0
    %222 = vmatpush1.bf16.msra.mxu0 %v191
    %223 = vmatprep.subr.bf16.mxu0 0
    %224 = vmatpush2.bf16.msra.mxu0 0
    %225 = vmatprep.subr.bf16.mxu0 0
    %226 = vmatpush2.bf16.msra.mxu0 0
    %227 = vmatprep.subr.bf16.mxu0 0
    %228 = vmatpush2.bf16.msra.mxu0 0
    %229 = vmatprep.subr.bf16.mxu0 0
    %230 = vmatpush2.bf16.msra.mxu0 0
    %231 = vmatprep.subr.bf16.mxu0 0
    %232 = vmatpush2.bf16.msra.mxu0 0
    %233 = vmatprep.subr.bf16.mxu0 0
    %234 = vmatpush2.bf16.msra.mxu0 0
    %235 = vmatprep.subr.bf16.mxu0 0
    %236 = vmatpush2.bf16.msra.mxu0 0
    %237 = vmatprep.subr.bf16.mxu0 0
    %238 = vmatpush2.bf16.msra.mxu0 0
    %239 = vmatprep.mubr.bf16.mxu0 0
    %240 = vmatmul.mubr.bf16.gmra.mxu0 %v135
    %v241 = vpop.f32.mrf.mxu0
    %v242 = vadd.f32 %v157, %v241
    %v243 = vpop.f32.mrf.mxu0
    %v244 = vpop.f32.mrf.mxu0
    %v245 = vpop.f32.mrf.mxu0
    %246 = vdwg.mxu0
    %247 = vst [vmem:[%s4] sm:$0xff] %v242
  $region25: #{base_one_stage_forward.5} parent=0 // pred_fallthru
    _
  // Predicated region
  $region26: #{base_one_stage_forward.5} parent=0 // pred_check
    _
  $region27: #{base_one_stage_forward.5} parent=0 // pred_check_branch
    %249 = sbr.rel (0) target = $region29
  $region28: #{base_one_stage_forward.5} parent=0 // pred_region
    _
  $region29: #{base_one_stage_forward.5} parent=0 // pred_fallthru
    _
  // Predicated region
  $region30: #{base_one_stage_forward.5} parent=0 // pred_check
    _
  $region31: #{base_one_stage_forward.5} parent=0 // pred_check_branch
    %251 = sbr.rel (0) target = $region33
  $region32: #{base_one_stage_forward.5} parent=0 // pred_region
    _
  $region33: #{base_one_stage_forward.5} parent=0 // pred_fallthru
    _

</llo_original>
